<compile_context>
chip_gen: v7x
topology: tpu7x:2x2x1
jax: 0.10.0
libtpu: 0.0.40
codegen_flags: <defaults>
</compile_context>

<pallas_src>
import jax
import jax.numpy as jnp
import numpy as np
from jax.experimental import pallas as pl
from jax.experimental.pallas import tpu as pltpu


# ------------------------- host-side static helpers ------------------------

def _out_size(size, k, s, p):
    return (size + 2 * p - k) // s + 1


def _build_h_select(n, h_in, h_out, kh, sh, ph):
    """0/1 height-gather matrices, one per kernel row.

    S[ki, b*h_out + oh, b*h_in + hh] = 1  iff  hh = oh*sh + ki - ph is a valid
    input row; out-of-bounds rows stay all-zero (== zero padding in H).
    Size is O((N*H)^2), independent of W and C.
    """
    s = np.zeros((kh, n * h_out, n * h_in), np.float32)
    for b in range(n):
        for oh in range(h_out):
            for ki in range(kh):
                hh = oh * sh + ki - ph
                if 0 <= hh < h_in:
                    s[ki, b * h_out + oh, b * h_in + hh] = 1.0
    return s


def _build_w_weight(w_fold, w_in, w_out, sw, pw):
    """Fold width taps / stride / padding + channel mixing into one matrix.

    Returns K of shape (w_in*cin, kh*w_out*cout): lane-concatenation over
    kernel row ki of K_ki with
        K_ki[(w, ci), (ow, co)] = w_fold[ki, w - (ow*sw - pw), ci, co]
    and zero outside the kernel support / image (== zero padding in W).
    """
    kh, kw, cin, cout = w_fold.shape
    blocks = []
    for ki in range(kh):
        k = np.zeros((w_in * cin, w_out * cout), np.float32)
        for ow in range(w_out):
            for kj in range(kw):
                w = ow * sw + kj - pw
                if 0 <= w < w_in:
                    k[w * cin:(w + 1) * cin,
                      ow * cout:(ow + 1) * cout] = w_fold[ki, kj]
        blocks.append(k)
    return np.concatenate(blocks, axis=1)


# ------------------------------ fused kernel -------------------------------

def _make_fused_kernel(plan):
    """plan: static per-layer metadata (tap counts / lane sizes only)."""

    def kernel(*refs):
        x_ref, out_ref = refs[0], refs[-1]
        a = x_ref[...]                                # (N*H, W*C) bf16
        idx = 1
        for layer in plan:
            if layer["type"] == "conv":
                k_ref, shift_ref = refs[idx], refs[idx + 1]
                idx += 2
                # One wide MXU matmul folds all width taps + channel mixing:
                #   b[:, ki*L:(ki+1)*L] is the kernel-row-ki partial result.
                b = jnp.dot(a, k_ref[...], preferred_element_type=jnp.float32)
                if layer["gather"]:
                    s_ref = refs[idx]
                    idx += 1
                    b = b.astype(jnp.bfloat16)        # exact for the gather
                    l_out = layer["l_out"]
                    acc = None
                    for ki in range(layer["taps"]):   # static, tiny
                        part = jnp.dot(
                            s_ref[ki], b[:, ki * l_out:(ki + 1) * l_out],
                            preferred_element_type=jnp.float32)
                        acc = part if acc is None else acc + part
                else:                                 # 1x1 conv: no H gather
                    acc = b
                # folded-BN shift + ReLU epilogue (VPU), back to bf16
                a = jnp.maximum(acc + shift_ref[...], 0.0).astype(jnp.bfloat16)
            else:                                     # fused 3x3 maxpool
                s_ref = refs[idx]
                idx += 1
                m = None
                for ki in range(layer["taps"]):       # height taps (gather)
                    g = jnp.dot(s_ref[ki], a,
                                preferred_element_type=jnp.float32)
                    m = g if m is None else jnp.maximum(m, g)
                c = layer["c"]
                cols = []
                for ow in range(layer["w_out"]):      # width taps: lane slices
                    cur = None
                    for kj in range(layer["kw"]):
                        w = ow * layer["sw"] + kj - layer["pw"]
                        if 0 <= w < layer["w_in"]:
                            blk = m[:, w * c:(w + 1) * c]
                            cur = blk if cur is None else jnp.maximum(cur, blk)
                    cols.append(cur)
                a = cols[0] if len(cols) == 1 else jnp.concatenate(cols, axis=-1)
        out_ref[...] = a.astype(out_ref.dtype)

    return kernel


# ------------------------- operand / plan construction ---------------------

def _build_fused_operands(layers, n, cin, h, w):
    """Fold BN into weights, build per-layer folded-width matrices and tiny
    height-selection matrices.  Returns (plan, operands, (n, hout, wout, cout))."""
    operands = []
    plan = []
    cur_h, cur_w, cur_c = h, w, cin
    eps = 1e-5
    for (params, (kh, kw), (sh, sw), (ph, pw)) in layers:
        wgt, bias, gamma, beta, mean, var = (
            np.asarray(p, np.float32) for p in params)     # wgt: (kh,kw,cin,cout)
        cout = wgt.shape[3]
        hout = _out_size(cur_h, kh, sh, ph)
        wout = _out_size(cur_w, kw, sw, pw)

        inv_std = gamma / np.sqrt(var + eps)
        w_fold = wgt * inv_std                              # BN scale into weights
        shift = beta + (bias - mean) * inv_std              # per-channel shift

        k_mat = _build_w_weight(w_fold, cur_w, wout, sw, pw)  # (W*Cin, kh*OW*Cout)
        shift_vec = np.tile(shift, wout)[None, :]             # (1, OW*Cout)
        operands.append(jnp.asarray(k_mat, jnp.bfloat16))
        operands.append(jnp.asarray(shift_vec, jnp.float32))

        gather = (kh > 1) or (sh > 1) or (ph > 0)
        if gather:
            s = _build_h_select(n, cur_h, hout, kh, sh, ph)
            operands.append(jnp.asarray(s, jnp.bfloat16))
        plan.append(dict(type="conv", taps=kh, l_out=wout * cout, gather=gather))
        cur_h, cur_w, cur_c = hout, wout, cout

    # final MaxPool2d(kernel=3, stride=(1, 2), padding=1)
    kh, kw, sh, sw, ph, pw = 3, 3, 1, 2, 1, 1
    hout = _out_size(cur_h, kh, sh, ph)
    wout = _out_size(cur_w, kw, sw, pw)
    s = _build_h_select(n, cur_h, hout, kh, sh, ph)
    operands.append(jnp.asarray(s, jnp.bfloat16))
    plan.append(dict(type="pool", taps=kh, kw=kw, sw=sw, pw=pw,
                     w_in=cur_w, w_out=wout, c=cur_c))

    return plan, operands, (n, hout, wout, cur_c)


# --------------------------------- wrapper ---------------------------------

def audio_encoder_gen(x_nchw, layers):
    """NCHW in / NCHW out (PyTorch convention); one fused Pallas call inside."""
    n, cin, h, w = x_nchw.shape
    plan, operands, (_, hout, wout, cout) = _build_fused_operands(
        layers, n, cin, h, w)

    # Rows = (batch, height); lanes = (width, channel), lane-dense.  Done once
    # per call in the wrapper (hoist further out if called in a loop).
    x2d = jnp.transpose(x_nchw, (0, 2, 3, 1)).reshape(n * h, w * cin)
    x2d = x2d.astype(jnp.bfloat16)

    inputs = (x2d,) + tuple(operands)
    kernel = _make_fused_kernel(plan)

    out = pl.pallas_call(
        kernel,
        out_shape=jax.ShapeDtypeStruct((n * hout, wout * cout), jnp.float32),
        in_specs=[pl.BlockSpec(memory_space=pltpu.MemorySpace.VMEM)
                  for _ in inputs],
        out_specs=pl.BlockSpec(memory_space=pltpu.MemorySpace.VMEM),
    )(*inputs)

    out = out.reshape(n, hout, wout, cout)
    return jnp.transpose(out, (0, 3, 1, 2))


# ----------------------- parameter init (deterministic) --------------------

def _init_conv_block(key, cin, cout, kh, kw):
    k1, k2, k3, k4 = jax.random.split(key, 4)
    w = jax.random.normal(k1, (kh, kw, cin, cout), jnp.float32)
    w = w / jnp.sqrt(float(kh * kw * cin))
    b = 0.01 * jax.random.normal(k2, (cout,), jnp.float32)
    gamma = 1.0 + 0.1 * jax.random.normal(k3, (cout,), jnp.float32)
    beta = 0.1 * jax.random.normal(k4, (cout,), jnp.float32)
    mean = jnp.zeros((cout,), jnp.float32)
    var = jnp.ones((cout,), jnp.float32)
    return (w, b, gamma, beta, mean, var)


def init_audio_encoder(key, in_channels=1, out_channels=64,
                       init_inner_channels=8, nlayers=4):
    """Mirrors AudioEncoderGen.__init__ layer construction."""
    channels = init_inner_channels
    cfgs = [(in_channels, channels, (1, 1), (1, 1), (0, 0))]
    for _ in range(nlayers - 2):
        cout = channels * 2
        tgt = cout if cout < out_channels else out_channels
        cfgs.append((channels, tgt, (3, 3), (2, 2), (1, 1)))
        if cout < out_channels:
            channels = cout
    cfgs.append((channels, out_channels, (3, 3), (1, 2), (1, 1)))

    keys = jax.random.split(key, len(cfgs))
    layers = []
    for k, (cin, cout, kern, stride, pad) in zip(keys, cfgs):
        layers.append((_init_conv_block(k, cin, cout, *kern),
                       kern, stride, pad))
    return layers


# --------------------------------- main ------------------------------------

if __name__ == "__main__":
    key = jax.random.PRNGKey(0)
    kx, kp = jax.random.split(key)

    # Small shapes consistent with the module: B=2, Cin=1, 16x16 "spectrogram".
    x = jax.random.normal(kx, (2, 1, 16, 16), jnp.float32)

    layers = init_audio_encoder(kp, in_channels=1, out_channels=64,
                                init_inner_channels=8, nlayers=4)

    out = audio_encoder_gen(x, layers)
    out = jax.block_until_ready(out)

    # Expected: (2, 64, 4, 1) for this configuration.
    assert out.shape == (2, 64, 4, 1), out.shape
    assert bool(jnp.all(jnp.isfinite(out)))
    print("KERNEL_OK")
</pallas_src>

<mosaic_0001>
module attributes {stable_mosaic.version = 11 : i64} {
  func.func @kernel(%arg0: memref<32x16xbf16, #tpu.memory_space<vmem>>, %arg1: memref<16x128xbf16, #tpu.memory_space<vmem>>, %arg2: memref<1x128xf32, #tpu.memory_space<vmem>>, %arg3: memref<128x384xbf16, #tpu.memory_space<vmem>>, %arg4: memref<1x128xf32, #tpu.memory_space<vmem>>, %arg5: memref<3x16x32xbf16, #tpu.memory_space<vmem>>, %arg6: memref<128x384xbf16, #tpu.memory_space<vmem>>, %arg7: memref<1x128xf32, #tpu.memory_space<vmem>>, %arg8: memref<3x8x16xbf16, #tpu.memory_space<vmem>>, %arg9: memref<128x384xbf16, #tpu.memory_space<vmem>>, %arg10: memref<1x128xf32, #tpu.memory_space<vmem>>, %arg11: memref<3x8x8xbf16, #tpu.memory_space<vmem>>, %arg12: memref<3x8x8xbf16, #tpu.memory_space<vmem>>, %arg13: memref<8x64xf32, #tpu.memory_space<vmem>>) attributes {dimension_semantics = [], scalar_prefetch = 0 : i64, scratch_operands = 0 : i64, tpu.core_type = #tpu.core_type<tc>} {
    %c0 = arith.constant 0 : index
    %c0_0 = arith.constant 0 : index
    %0 = vector.load %arg0[%c0, %c0_0] : memref<32x16xbf16, #tpu.memory_space<vmem>>, vector<32x16xbf16>
    %c0_1 = arith.constant 0 : index
    %c0_2 = arith.constant 0 : index
    %1 = vector.load %arg1[%c0_1, %c0_2] : memref<16x128xbf16, #tpu.memory_space<vmem>>, vector<16x128xbf16>
    %cst = arith.constant dense<0.000000e+00> : vector<32x128xf32>
    %2 = tpu.matmul %0, %1, %cst {dimension_numbers = #tpu.dot_dimension_numbers<[1], [0], [0], [1], [0, 0, 1, 1], [], []>} : vector<32x16xbf16>, vector<16x128xbf16>, vector<32x128xf32> -> vector<32x128xf32>
    %c0_3 = arith.constant 0 : index
    %c0_4 = arith.constant 0 : index
    %3 = vector.load %arg2[%c0_3, %c0_4] : memref<1x128xf32, #tpu.memory_space<vmem>>, vector<1x128xf32>
    %4 = vector.broadcast %3 : vector<1x128xf32> to vector<32x128xf32>
    %5 = arith.addf %2, %4 : vector<32x128xf32>
    %cst_5 = arith.constant 0.000000e+00 : f32
    %6 = vector.broadcast %cst_5 : f32 to vector<32x128xf32>
    %7 = arith.maximumf %5, %6 : vector<32x128xf32>
    %8 = arith.truncf %7 : vector<32x128xf32> to vector<32x128xbf16>
    %c0_6 = arith.constant 0 : index
    %c0_7 = arith.constant 0 : index
    %9 = vector.load %arg3[%c0_6, %c0_7] : memref<128x384xbf16, #tpu.memory_space<vmem>>, vector<128x384xbf16>
    %cst_8 = arith.constant dense<0.000000e+00> : vector<32x384xf32>
    %10 = tpu.matmul %8, %9, %cst_8 {dimension_numbers = #tpu.dot_dimension_numbers<[1], [0], [0], [1], [0, 0, 1, 1], [], []>} : vector<32x128xbf16>, vector<128x384xbf16>, vector<32x384xf32> -> vector<32x384xf32>
    %11 = arith.truncf %10 : vector<32x384xf32> to vector<32x384xbf16>
    %c0_9 = arith.constant 0 : index
    %c0_10 = arith.constant 0 : index
    %c0_11 = arith.constant 0 : index
    %12 = vector.load %arg5[%c0_9, %c0_10, %c0_11] : memref<3x16x32xbf16, #tpu.memory_space<vmem>>, vector<1x16x32xbf16>
    %13 = vector.shape_cast %12 : vector<1x16x32xbf16> to vector<16x32xbf16>
    %14 = vector.extract_strided_slice %11 {offsets = [0, 0], sizes = [32, 128], strides = [1, 1]} : vector<32x384xbf16> to vector<32x128xbf16>
    %cst_12 = arith.constant dense<0.000000e+00> : vector<16x128xf32>
    %15 = tpu.matmul %13, %14, %cst_12 {dimension_numbers = #tpu.dot_dimension_numbers<[1], [0], [0], [1], [0, 0, 1, 1], [], []>} : vector<16x32xbf16>, vector<32x128xbf16>, vector<16x128xf32> -> vector<16x128xf32>
    %c1 = arith.constant 1 : index
    %c0_13 = arith.constant 0 : index
    %c0_14 = arith.constant 0 : index
    %16 = vector.load %arg5[%c1, %c0_13, %c0_14] : memref<3x16x32xbf16, #tpu.memory_space<vmem>>, vector<1x16x32xbf16>
    %17 = vector.shape_cast %16 : vector<1x16x32xbf16> to vector<16x32xbf16>
    %18 = vector.extract_strided_slice %11 {offsets = [0, 128], sizes = [32, 128], strides = [1, 1]} : vector<32x384xbf16> to vector<32x128xbf16>
    %cst_15 = arith.constant dense<0.000000e+00> : vector<16x128xf32>
    %19 = tpu.matmul %17, %18, %cst_15 {dimension_numbers = #tpu.dot_dimension_numbers<[1], [0], [0], [1], [0, 0, 1, 1], [], []>} : vector<16x32xbf16>, vector<32x128xbf16>, vector<16x128xf32> -> vector<16x128xf32>
    %20 = arith.addf %15, %19 : vector<16x128xf32>
    %c2 = arith.constant 2 : index
    %c0_16 = arith.constant 0 : index
    %c0_17 = arith.constant 0 : index
    %21 = vector.load %arg5[%c2, %c0_16, %c0_17] : memref<3x16x32xbf16, #tpu.memory_space<vmem>>, vector<1x16x32xbf16>
    %22 = vector.shape_cast %21 : vector<1x16x32xbf16> to vector<16x32xbf16>
    %23 = vector.extract_strided_slice %11 {offsets = [0, 256], sizes = [32, 128], strides = [1, 1]} : vector<32x384xbf16> to vector<32x128xbf16>
    %cst_18 = arith.constant dense<0.000000e+00> : vector<16x128xf32>
    %24 = tpu.matmul %22, %23, %cst_18 {dimension_numbers = #tpu.dot_dimension_numbers<[1], [0], [0], [1], [0, 0, 1, 1], [], []>} : vector<16x32xbf16>, vector<32x128xbf16>, vector<16x128xf32> -> vector<16x128xf32>
    %25 = arith.addf %20, %24 : vector<16x128xf32>
    %c0_19 = arith.constant 0 : index
    %c0_20 = arith.constant 0 : index
    %26 = vector.load %arg4[%c0_19, %c0_20] : memref<1x128xf32, #tpu.memory_space<vmem>>, vector<1x128xf32>
    %27 = vector.broadcast %26 : vector<1x128xf32> to vector<16x128xf32>
    %28 = arith.addf %25, %27 : vector<16x128xf32>
    %cst_21 = arith.constant 0.000000e+00 : f32
    %29 = vector.broadcast %cst_21 : f32 to vector<16x128xf32>
    %30 = arith.maximumf %28, %29 : vector<16x128xf32>
    %31 = arith.truncf %30 : vector<16x128xf32> to vector<16x128xbf16>
    %c0_22 = arith.constant 0 : index
    %c0_23 = arith.constant 0 : index
    %32 = vector.load %arg6[%c0_22, %c0_23] : memref<128x384xbf16, #tpu.memory_space<vmem>>, vector<128x384xbf16>
    %cst_24 = arith.constant dense<0.000000e+00> : vector<16x384xf32>
    %33 = tpu.matmul %31, %32, %cst_24 {dimension_numbers = #tpu.dot_dimension_numbers<[1], [0], [0], [1], [0, 0, 1, 1], [], []>} : vector<16x128xbf16>, vector<128x384xbf16>, vector<16x384xf32> -> vector<16x384xf32>
    %34 = arith.truncf %33 : vector<16x384xf32> to vector<16x384xbf16>
    %c0_25 = arith.constant 0 : index
    %c0_26 = arith.constant 0 : index
    %c0_27 = arith.constant 0 : index
    %35 = vector.load %arg8[%c0_25, %c0_26, %c0_27] : memref<3x8x16xbf16, #tpu.memory_space<vmem>>, vector<1x8x16xbf16>
    %36 = vector.shape_cast %35 : vector<1x8x16xbf16> to vector<8x16xbf16>
    %37 = vector.extract_strided_slice %34 {offsets = [0, 0], sizes = [16, 128], strides = [1, 1]} : vector<16x384xbf16> to vector<16x128xbf16>
    %cst_28 = arith.constant dense<0.000000e+00> : vector<8x128xf32>
    %38 = tpu.matmul %36, %37, %cst_28 {dimension_numbers = #tpu.dot_dimension_numbers<[1], [0], [0], [1], [0, 0, 1, 1], [], []>} : vector<8x16xbf16>, vector<16x128xbf16>, vector<8x128xf32> -> vector<8x128xf32>
    %c1_29 = arith.constant 1 : index
    %c0_30 = arith.constant 0 : index
    %c0_31 = arith.constant 0 : index
    %39 = vector.load %arg8[%c1_29, %c0_30, %c0_31] : memref<3x8x16xbf16, #tpu.memory_space<vmem>>, vector<1x8x16xbf16>
    %40 = vector.shape_cast %39 : vector<1x8x16xbf16> to vector<8x16xbf16>
    %41 = vector.extract_strided_slice %34 {offsets = [0, 128], sizes = [16, 128], strides = [1, 1]} : vector<16x384xbf16> to vector<16x128xbf16>
    %cst_32 = arith.constant dense<0.000000e+00> : vector<8x128xf32>
    %42 = tpu.matmul %40, %41, %cst_32 {dimension_numbers = #tpu.dot_dimension_numbers<[1], [0], [0], [1], [0, 0, 1, 1], [], []>} : vector<8x16xbf16>, vector<16x128xbf16>, vector<8x128xf32> -> vector<8x128xf32>
    %43 = arith.addf %38, %42 : vector<8x128xf32>
    %c2_33 = arith.constant 2 : index
    %c0_34 = arith.constant 0 : index
    %c0_35 = arith.constant 0 : index
    %44 = vector.load %arg8[%c2_33, %c0_34, %c0_35] : memref<3x8x16xbf16, #tpu.memory_space<vmem>>, vector<1x8x16xbf16>
    %45 = vector.shape_cast %44 : vector<1x8x16xbf16> to vector<8x16xbf16>
    %46 = vector.extract_strided_slice %34 {offsets = [0, 256], sizes = [16, 128], strides = [1, 1]} : vector<16x384xbf16> to vector<16x128xbf16>
    %cst_36 = arith.constant dense<0.000000e+00> : vector<8x128xf32>
    %47 = tpu.matmul %45, %46, %cst_36 {dimension_numbers = #tpu.dot_dimension_numbers<[1], [0], [0], [1], [0, 0, 1, 1], [], []>} : vector<8x16xbf16>, vector<16x128xbf16>, vector<8x128xf32> -> vector<8x128xf32>
    %48 = arith.addf %43, %47 : vector<8x128xf32>
    %c0_37 = arith.constant 0 : index
    %c0_38 = arith.constant 0 : index
    %49 = vector.load %arg7[%c0_37, %c0_38] : memref<1x128xf32, #tpu.memory_space<vmem>>, vector<1x128xf32>
    %50 = vector.broadcast %49 : vector<1x128xf32> to vector<8x128xf32>
    %51 = arith.addf %48, %50 : vector<8x128xf32>
    %cst_39 = arith.constant 0.000000e+00 : f32
    %52 = vector.broadcast %cst_39 : f32 to vector<8x128xf32>
    %53 = arith.maximumf %51, %52 : vector<8x128xf32>
    %54 = arith.truncf %53 : vector<8x128xf32> to vector<8x128xbf16>
    %c0_40 = arith.constant 0 : index
    %c0_41 = arith.constant 0 : index
    %55 = vector.load %arg9[%c0_40, %c0_41] : memref<128x384xbf16, #tpu.memory_space<vmem>>, vector<128x384xbf16>
    %cst_42 = arith.constant dense<0.000000e+00> : vector<8x384xf32>
    %56 = tpu.matmul %54, %55, %cst_42 {dimension_numbers = #tpu.dot_dimension_numbers<[1], [0], [0], [1], [0, 0, 1, 1], [], []>} : vector<8x128xbf16>, vector<128x384xbf16>, vector<8x384xf32> -> vector<8x384xf32>
    %57 = arith.truncf %56 : vector<8x384xf32> to vector<8x384xbf16>
    %c0_43 = arith.constant 0 : index
    %c0_44 = arith.constant 0 : index
    %c0_45 = arith.constant 0 : index
    %58 = vector.load %arg11[%c0_43, %c0_44, %c0_45] : memref<3x8x8xbf16, #tpu.memory_space<vmem>>, vector<1x8x8xbf16>
    %59 = vector.shape_cast %58 : vector<1x8x8xbf16> to vector<8x8xbf16>
    %60 = vector.extract_strided_slice %57 {offsets = [0, 0], sizes = [8, 128], strides = [1, 1]} : vector<8x384xbf16> to vector<8x128xbf16>
    %cst_46 = arith.constant dense<0.000000e+00> : vector<8x128xf32>
    %61 = tpu.matmul %59, %60, %cst_46 {dimension_numbers = #tpu.dot_dimension_numbers<[1], [0], [0], [1], [0, 0, 1, 1], [], []>} : vector<8x8xbf16>, vector<8x128xbf16>, vector<8x128xf32> -> vector<8x128xf32>
    %c1_47 = arith.constant 1 : index
    %c0_48 = arith.constant 0 : index
    %c0_49 = arith.constant 0 : index
    %62 = vector.load %arg11[%c1_47, %c0_48, %c0_49] : memref<3x8x8xbf16, #tpu.memory_space<vmem>>, vector<1x8x8xbf16>
    %63 = vector.shape_cast %62 : vector<1x8x8xbf16> to vector<8x8xbf16>
    %64 = vector.extract_strided_slice %57 {offsets = [0, 128], sizes = [8, 128], strides = [1, 1]} : vector<8x384xbf16> to vector<8x128xbf16>
    %cst_50 = arith.constant dense<0.000000e+00> : vector<8x128xf32>
    %65 = tpu.matmul %63, %64, %cst_50 {dimension_numbers = #tpu.dot_dimension_numbers<[1], [0], [0], [1], [0, 0, 1, 1], [], []>} : vector<8x8xbf16>, vector<8x128xbf16>, vector<8x128xf32> -> vector<8x128xf32>
    %66 = arith.addf %61, %65 : vector<8x128xf32>
    %c2_51 = arith.constant 2 : index
    %c0_52 = arith.constant 0 : index
    %c0_53 = arith.constant 0 : index
    %67 = vector.load %arg11[%c2_51, %c0_52, %c0_53] : memref<3x8x8xbf16, #tpu.memory_space<vmem>>, vector<1x8x8xbf16>
    %68 = vector.shape_cast %67 : vector<1x8x8xbf16> to vector<8x8xbf16>
    %69 = vector.extract_strided_slice %57 {offsets = [0, 256], sizes = [8, 128], strides = [1, 1]} : vector<8x384xbf16> to vector<8x128xbf16>
    %cst_54 = arith.constant dense<0.000000e+00> : vector<8x128xf32>
    %70 = tpu.matmul %68, %69, %cst_54 {dimension_numbers = #tpu.dot_dimension_numbers<[1], [0], [0], [1], [0, 0, 1, 1], [], []>} : vector<8x8xbf16>, vector<8x128xbf16>, vector<8x128xf32> -> vector<8x128xf32>
    %71 = arith.addf %66, %70 : vector<8x128xf32>
    %c0_55 = arith.constant 0 : index
    %c0_56 = arith.constant 0 : index
    %72 = vector.load %arg10[%c0_55, %c0_56] : memref<1x128xf32, #tpu.memory_space<vmem>>, vector<1x128xf32>
    %73 = vector.broadcast %72 : vector<1x128xf32> to vector<8x128xf32>
    %74 = arith.addf %71, %73 : vector<8x128xf32>
    %cst_57 = arith.constant 0.000000e+00 : f32
    %75 = vector.broadcast %cst_57 : f32 to vector<8x128xf32>
    %76 = arith.maximumf %74, %75 : vector<8x128xf32>
    %77 = arith.truncf %76 : vector<8x128xf32> to vector<8x128xbf16>
    %c0_58 = arith.constant 0 : index
    %c0_59 = arith.constant 0 : index
    %c0_60 = arith.constant 0 : index
    %78 = vector.load %arg12[%c0_58, %c0_59, %c0_60] : memref<3x8x8xbf16, #tpu.memory_space<vmem>>, vector<1x8x8xbf16>
    %79 = vector.shape_cast %78 : vector<1x8x8xbf16> to vector<8x8xbf16>
    %cst_61 = arith.constant dense<0.000000e+00> : vector<8x128xf32>
    %80 = tpu.matmul %79, %77, %cst_61 {dimension_numbers = #tpu.dot_dimension_numbers<[1], [0], [0], [1], [0, 0, 1, 1], [], []>} : vector<8x8xbf16>, vector<8x128xbf16>, vector<8x128xf32> -> vector<8x128xf32>
    %c1_62 = arith.constant 1 : index
    %c0_63 = arith.constant 0 : index
    %c0_64 = arith.constant 0 : index
    %81 = vector.load %arg12[%c1_62, %c0_63, %c0_64] : memref<3x8x8xbf16, #tpu.memory_space<vmem>>, vector<1x8x8xbf16>
    %82 = vector.shape_cast %81 : vector<1x8x8xbf16> to vector<8x8xbf16>
    %cst_65 = arith.constant dense<0.000000e+00> : vector<8x128xf32>
    %83 = tpu.matmul %82, %77, %cst_65 {dimension_numbers = #tpu.dot_dimension_numbers<[1], [0], [0], [1], [0, 0, 1, 1], [], []>} : vector<8x8xbf16>, vector<8x128xbf16>, vector<8x128xf32> -> vector<8x128xf32>
    %84 = arith.maximumf %80, %83 : vector<8x128xf32>
    %c2_66 = arith.constant 2 : index
    %c0_67 = arith.constant 0 : index
    %c0_68 = arith.constant 0 : index
    %85 = vector.load %arg12[%c2_66, %c0_67, %c0_68] : memref<3x8x8xbf16, #tpu.memory_space<vmem>>, vector<1x8x8xbf16>
    %86 = vector.shape_cast %85 : vector<1x8x8xbf16> to vector<8x8xbf16>
    %cst_69 = arith.constant dense<0.000000e+00> : vector<8x128xf32>
    %87 = tpu.matmul %86, %77, %cst_69 {dimension_numbers = #tpu.dot_dimension_numbers<[1], [0], [0], [1], [0, 0, 1, 1], [], []>} : vector<8x8xbf16>, vector<8x128xbf16>, vector<8x128xf32> -> vector<8x128xf32>
    %88 = arith.maximumf %84, %87 : vector<8x128xf32>
    %89 = vector.extract_strided_slice %88 {offsets = [0, 0], sizes = [8, 64], strides = [1, 1]} : vector<8x128xf32> to vector<8x64xf32>
    %90 = vector.extract_strided_slice %88 {offsets = [0, 64], sizes = [8, 64], strides = [1, 1]} : vector<8x128xf32> to vector<8x64xf32>
    %91 = arith.maximumf %89, %90 : vector<8x64xf32>
    %c0_70 = arith.constant 0 : index
    %c0_71 = arith.constant 0 : index
    %92 = vector.load %arg13[%c0_70, %c0_71] : memref<8x64xf32, #tpu.memory_space<vmem>>, vector<8x64xf32>
    tpu.vector_store %arg13[%c0_70, %c0_71], %91 {strides = array<i32>} : memref<8x64xf32, #tpu.memory_space<vmem>>, vector<8x64xf32>,
    return
  }
}

</mosaic_0001>

<llo_original>
// kernel: tpu_custom_call.1
$region0: #{tpu_custom_call.1}
  #allocation0 [shape = 'u32[]', space=smem, size = 0x4, offset = 0x4, fixed_abs, tag = 'smem constant byte address 0x4 - core index']
  #allocation1 [shape = 'u32[144,128]{1,0:T(1,128)}', space=vmem, size = 0x12000, scoped, tag = 'internal scratch']
  %s0 = inlined_call_operand.vmem [shape: bf16[32,16], index: 0, kind: input, shape index: {}]
  %s1 = inlined_call_operand.hbm [shape: bf16[16,128], index: 1, kind: input, shape index: {}]
  %s2 = inlined_call_operand.vmem [shape: f32[1,128], index: 2, kind: input, shape index: {}]
  %s3 = inlined_call_operand.hbm [shape: bf16[128,384], index: 3, kind: input, shape index: {}]
  %s4 = inlined_call_operand.hbm [shape: f32[1,128], index: 4, kind: input, shape index: {}]
  %s5 = inlined_call_operand.vmem [shape: bf16[3,16,32], index: 5, kind: input, shape index: {}]
  %s6 = inlined_call_operand.hbm [shape: bf16[128,384], index: 6, kind: input, shape index: {}]
  %s7 = inlined_call_operand.hbm [shape: f32[1,128], index: 7, kind: input, shape index: {}]
  %s8 = inlined_call_operand.vmem [shape: bf16[3,8,16], index: 8, kind: input, shape index: {}]
  %s9 = inlined_call_operand.hbm [shape: bf16[128,384], index: 9, kind: input, shape index: {}]
  %s10 = inlined_call_operand.hbm [shape: f32[1,128], index: 10, kind: input, shape index: {}]
  %s11 = inlined_call_operand.vmem [shape: bf16[3,8,8], index: 11, kind: input, shape index: {}]
  %s12 = inlined_call_operand.vmem [shape: bf16[3,8,8], index: 12, kind: input, shape index: {}]
  %s13 = inlined_call_operand.hbm [shape: f32[8,64], index: 13, kind: output, shape index: {}]
  %s14 = sld [smem:[#allocation0]]
  $region90: #{tpu_custom_call.1} parent=0
    _
  %s16 = ssub.s32 1, %s14
  %s17 = scalar_select 0, %s16, %s14
  $region1: #{tpu_custom_call.1} parent=0
    #allocation2 [shape = 'u8[4096]{0}', space=vmem, size = 0x1000, scoped, tag = 'input window, operand 1, single buffered']
    #allocation3 [shape = 's32[1]{0}', space=sflag, size = 0x4, scoped, tag = 'scoped memory for tpu_custom_call.1']
    #allocation4 [shape = 's32[1]{0}', space=sflag, size = 0x4, scoped, tag = 'scoped memory for tpu_custom_call.1']
    #allocation5 [shape = 'u8[98304]{0}', space=vmem, size = 0x18000, scoped, tag = 'input window, operand 3, single buffered']
    #allocation6 [shape = 's32[1]{0}', space=sflag, size = 0x4, scoped, tag = 'scoped memory for tpu_custom_call.1']
    #allocation7 [shape = 'u8[512]{0}', space=vmem, size = 0x400, scoped, tag = 'input window, operand 4, single buffered']
    #allocation8 [shape = 'u8[98304]{0}', space=vmem, size = 0x18000, scoped, tag = 'input window, operand 6, single buffered']
    #allocation9 [shape = 's32[1]{0}', space=sflag, size = 0x4, scoped, tag = 'scoped memory for tpu_custom_call.1']
    #allocation10 [shape = 'u8[512]{0}', space=vmem, size = 0x400, scoped, tag = 'input window, operand 7, single buffered']
    #allocation11 [shape = 'u8[98304]{0}', space=vmem, size = 0x18000, scoped, tag = 'input window, operand 9, single buffered']
    #allocation12 [shape = 's32[1]{0}', space=sflag, size = 0x4, scoped, tag = 'scoped memory for tpu_custom_call.1']
    #allocation13 [shape = 'u8[512]{0}', space=vmem, size = 0x400, scoped, tag = 'input window, operand 10, single buffered']
    #allocation14 [shape = 'u8[4096]{0}', space=vmem, size = 0x1000, scoped, tag = 'output window, operand 0, single buffered']
    %18 = vsyncpa [#allocation3], 0
    %19 = vsyncpa [#allocation6], 0
    %20 = vsyncpa [#allocation9], 0
    %21 = vsyncpa [#allocation12], 0
    %22 = vsyncpa [#allocation4], 0
    // Predicated region
    $region2: #{tpu_custom_call.1} parent=1 // pred_check
      _
    $region3: #{tpu_custom_call.1} parent=1 // pred_check_branch
      %24 = sbr.rel (0) target = $region5
    $region4: #{tpu_custom_call.1} parent=1 // pred_region
      _
    $region5: #{tpu_custom_call.1} parent=1 // pred_fallthru
      _
    // Predicated region
    $region6: #{tpu_custom_call.1} parent=1 // pred_check
      _
    $region7: #{tpu_custom_call.1} parent=1 // pred_check_branch
      %26 = sbr.rel (0) target = $region9
    $region8: #{tpu_custom_call.1} parent=1 // pred_region
      %s28 = ssub.s32 128, 128
      %29 = vsyncadd [#allocation3], %s28
      %s30 = sshll.u32 [#allocation2], 4
      %s31 = int_to_ptr.vmem [resolvable:$true] %s30
      %36 = dma.hbm_to_vmem [thread:$0]  %s1, 128, %s31, [#allocation3], 64, 64, 4
    $region9: #{tpu_custom_call.1} parent=1 // pred_fallthru
      _
    // Predicated region
    $region10: #{tpu_custom_call.1} parent=1 // pred_check
      _
    $region11: #{tpu_custom_call.1} parent=1 // pred_check_branch
      %38 = sbr.rel (0) target = $region13
    $region12: #{tpu_custom_call.1} parent=1 // pred_region
      _
    $region13: #{tpu_custom_call.1} parent=1 // pred_fallthru
      _
    // Predicated region
    $region14: #{tpu_custom_call.1} parent=1 // pred_check
      _
    $region15: #{tpu_custom_call.1} parent=1 // pred_check_branch
      %40 = sbr.rel (0) target = $region17
    $region16: #{tpu_custom_call.1} parent=1 // pred_region
      %s42 = ssub.s32 3072, 3072
      %43 = vsyncadd [#allocation6], %s42
      %s44 = sshll.u32 [#allocation5], 4
      %s45 = int_to_ptr.vmem [resolvable:$true] %s44
      %50 = dma.hbm_to_vmem [thread:$0]  %s3, 3072, %s45, [#allocation6], 192, 192, 12
    $region17: #{tpu_custom_call.1} parent=1 // pred_fallthru
      _
    // Predicated region
    $region18: #{tpu_custom_call.1} parent=1 // pred_check
      _
    $region19: #{tpu_custom_call.1} parent=1 // pred_check_branch
      %52 = sbr.rel (0) target = $region21
    $region20: #{tpu_custom_call.1} parent=1 // pred_region
      %s54 = ssub.s32 16, 16
      %55 = vsyncadd [#allocation6], %s54
      %s57 = sshll.u32 [#allocation7], 4
      %s58 = int_to_ptr.vmem [resolvable:$true] %s57
      %60 = dma.hbm_to_vmem [thread:$0]  %s4, 16, %s58, [#allocation6]
    $region21: #{tpu_custom_call.1} parent=1 // pred_fallthru
      _
    // Predicated region
    $region22: #{tpu_custom_call.1} parent=1 // pred_check
      _
    $region23: #{tpu_custom_call.1} parent=1 // pred_check_branch
      %62 = sbr.rel (0) target = $region25
    $region24: #{tpu_custom_call.1} parent=1 // pred_region
      _
    $region25: #{tpu_custom_call.1} parent=1 // pred_fallthru
      _
    // Predicated region
    $region26: #{tpu_custom_call.1} parent=1 // pred_check
      _
    $region27: #{tpu_custom_call.1} parent=1 // pred_check_branch
      %64 = sbr.rel (0) target = $region29
    $region28: #{tpu_custom_call.1} parent=1 // pred_region
      %s66 = ssub.s32 3072, 3072
      %67 = vsyncadd [#allocation9], %s66
      %s68 = sshll.u32 [#allocation8], 4
      %s69 = int_to_ptr.vmem [resolvable:$true] %s68
      %74 = dma.hbm_to_vmem [thread:$0]  %s6, 3072, %s69, [#allocation9], 192, 192, 12
    $region29: #{tpu_custom_call.1} parent=1 // pred_fallthru
      _
    // Predicated region
    $region30: #{tpu_custom_call.1} parent=1 // pred_check
      _
    $region31: #{tpu_custom_call.1} parent=1 // pred_check_branch
      %76 = sbr.rel (0) target = $region33
    $region32: #{tpu_custom_call.1} parent=1 // pred_region
      %s78 = ssub.s32 16, 16
      %79 = vsyncadd [#allocation9], %s78
      %s81 = sshll.u32 [#allocation10], 4
      %s82 = int_to_ptr.vmem [resolvable:$true] %s81
      %84 = dma.hbm_to_vmem [thread:$0]  %s7, 16, %s82, [#allocation9]
    $region33: #{tpu_custom_call.1} parent=1 // pred_fallthru
      _
    // Predicated region
    $region34: #{tpu_custom_call.1} parent=1 // pred_check
      _
    $region35: #{tpu_custom_call.1} parent=1 // pred_check_branch
      %86 = sbr.rel (0) target = $region37
    $region36: #{tpu_custom_call.1} parent=1 // pred_region
      _
    $region37: #{tpu_custom_call.1} parent=1 // pred_fallthru
      _
    // Predicated region
    $region38: #{tpu_custom_call.1} parent=1 // pred_check
      _
    $region39: #{tpu_custom_call.1} parent=1 // pred_check_branch
      %88 = sbr.rel (0) target = $region41
    $region40: #{tpu_custom_call.1} parent=1 // pred_region
      %s90 = ssub.s32 3072, 3072
      %91 = vsyncadd [#allocation12], %s90
      %s92 = sshll.u32 [#allocation11], 4
      %s93 = int_to_ptr.vmem [resolvable:$true] %s92
      %98 = dma.hbm_to_vmem [thread:$0]  %s9, 3072, %s93, [#allocation12], 192, 192, 12
    $region41: #{tpu_custom_call.1} parent=1 // pred_fallthru
      _
    // Predicated region
    $region42: #{tpu_custom_call.1} parent=1 // pred_check
      _
    $region43: #{tpu_custom_call.1} parent=1 // pred_check_branch
      %100 = sbr.rel (0) target = $region45
    $region44: #{tpu_custom_call.1} parent=1 // pred_region
      %s102 = ssub.s32 16, 16
      %103 = vsyncadd [#allocation12], %s102
      %s105 = sshll.u32 [#allocation13], 4
      %s106 = int_to_ptr.vmem [resolvable:$true] %s105
      %108 = dma.hbm_to_vmem [thread:$0]  %s10, 16, %s106, [#allocation12]
    $region45: #{tpu_custom_call.1} parent=1 // pred_fallthru
      _
    // Predicated region
    $region46: #{tpu_custom_call.1} parent=1 // pred_check
      _
    $region47: #{tpu_custom_call.1} parent=1 // pred_check_branch
      %110 = sbr.rel (0) target = $region49
    $region48: #{tpu_custom_call.1} parent=1 // pred_region
      _
    $region49: #{tpu_custom_call.1} parent=1 // pred_fallthru
      _
    // Predicated region
    $region50: #{tpu_custom_call.1} parent=1 // pred_check
      _
    $region51: #{tpu_custom_call.1} parent=1 // pred_check_branch
      %112 = sbr.rel (0) target = $region53
    $region52: #{tpu_custom_call.1} parent=1 // pred_region
      _
    $region53: #{tpu_custom_call.1} parent=1 // pred_fallthru
      _
    // Predicated region
    $region54: #{tpu_custom_call.1} parent=1 // pred_check
      _
    $region55: #{tpu_custom_call.1} parent=1 // pred_check_branch
      %114 = sbr.rel (0) target = $region57
    $region56: #{tpu_custom_call.1} parent=1 // pred_region
      %115 = dma.done [#allocation3], 128
    $region57: #{tpu_custom_call.1} parent=1 // pred_fallthru
      _
    // Predicated region
    $region58: #{tpu_custom_call.1} parent=1 // pred_check
      _
    $region59: #{tpu_custom_call.1} parent=1 // pred_check_branch
      %117 = sbr.rel (0) target = $region61
    $region60: #{tpu_custom_call.1} parent=1 // pred_region
      %118 = dma.done [#allocation6], 3072
    $region61: #{tpu_custom_call.1} parent=1 // pred_fallthru
      _
    // Predicated region
    $region62: #{tpu_custom_call.1} parent=1 // pred_check
      _
    $region63: #{tpu_custom_call.1} parent=1 // pred_check_branch
      %120 = sbr.rel (0) target = $region65
    $region64: #{tpu_custom_call.1} parent=1 // pred_region
      %121 = dma.done [#allocation6], 16
    $region65: #{tpu_custom_call.1} parent=1 // pred_fallthru
      _
    // Predicated region
    $region66: #{tpu_custom_call.1} parent=1 // pred_check
      _
    $region67: #{tpu_custom_call.1} parent=1 // pred_check_branch
      %123 = sbr.rel (0) target = $region69
    $region68: #{tpu_custom_call.1} parent=1 // pred_region
      %124 = dma.done [#allocation9], 3072
    $region69: #{tpu_custom_call.1} parent=1 // pred_fallthru
      _
    // Predicated region
    $region70: #{tpu_custom_call.1} parent=1 // pred_check
      _
    $region71: #{tpu_custom_call.1} parent=1 // pred_check_branch
      %126 = sbr.rel (0) target = $region73
    $region72: #{tpu_custom_call.1} parent=1 // pred_region
      %127 = dma.done [#allocation9], 16
    $region73: #{tpu_custom_call.1} parent=1 // pred_fallthru
      _
    // Predicated region
    $region74: #{tpu_custom_call.1} parent=1 // pred_check
      _
    $region75: #{tpu_custom_call.1} parent=1 // pred_check_branch
      %129 = sbr.rel (0) target = $region77
    $region76: #{tpu_custom_call.1} parent=1 // pred_region
      %130 = dma.done [#allocation12], 3072
    $region77: #{tpu_custom_call.1} parent=1 // pred_fallthru
      _
    // Predicated region
    $region78: #{tpu_custom_call.1} parent=1 // pred_check
      _
    $region79: #{tpu_custom_call.1} parent=1 // pred_check_branch
      %132 = sbr.rel (0) target = $region81
    $region80: #{tpu_custom_call.1} parent=1 // pred_region
      %133 = dma.done [#allocation12], 16
    $region81: #{tpu_custom_call.1} parent=1 // pred_fallthru
      _
    %v135 = vld [vmem:[%s0] sm:$0xf]
    %v136 = vld [vmem:[%s0 + $0x4] sm:$0xf]
    %v137 = vld [vmem:[%s0 + $0x8] sm:$0xf]
    %v138 = vld [vmem:[%s0 + $0xc] sm:$0xf]
    %v139 = vld [vmem:[#allocation2] sm:$0xf]
    %v140 = vld [vmem:[#allocation2 + $0x4] sm:$0xf]
    %v141 = vld [vmem:[%s2] sm:$0x1]
    %v143 = vlaneseq
    %v144 = vshrl.u32 %v143, 7
    %v145 = vsub.s32 0, %v144
    %v146 = vrot.slane %v141, %v145
    %v152 = vunpack.c.l.b16 %v135
    %v153 = vunpack.c.l.b16 %v136
    %v154 = vunpack.c.l.b16 %v137
    %v155 = vunpack.c.l.b16 %v138
    %v156 = vpack.c.b16 %v153, %v152
    %v157 = vpack.c.b16 %v155, %v154
    %v160 = vunpack.c.l.b16 %v139
    %v161 = vunpack.c.l.b16 %v140
    %v162 = vpack.c.b16 %v161, %v160
    %vm164 = vcmask 130048
    %v166 = vsel %vm164, %v156, 0
    %v169 = vsel %vm164, %v157, 0
    %171 = vmatprep.subr.bf16.mxu0 0
    %172 = vmatpush1.bf16.msra.mxu0 %v162
    %173 = vmatprep.subr.bf16.mxu0 0
    %174 = vmatpush1.bf16.msra.mxu0 0
    %175 = vmatprep.subr.bf16.mxu0 0
    %176 = vmatpush1.bf16.msra.mxu0 0
    %177 = vmatprep.subr.bf16.mxu0 0
    %178 = vmatpush1.bf16.msra.mxu0 0
    %179 = vmatprep.subr.bf16.mxu0 0
    %180 = vmatpush1.bf16.msra.mxu0 0
    %181 = vmatprep.subr.bf16.mxu0 0
    %182 = vmatpush1.bf16.msra.mxu0 0
    %183 = vmatprep.subr.bf16.mxu0 0
    %184 = vmatpush1.bf16.msra.mxu0 0
    %185 = vmatprep.subr.bf16.mxu0 0
    %186 = vmatpush1.bf16.msra.mxu0 0
    %187 = vmatprep.subr.bf16.mxu0 0
    %188 = vmatpush1.bf16.msra.mxu0 0
    %189 = vmatprep.subr.bf16.mxu0 0
    %190 = vmatpush1.bf16.msra.mxu0 0
    %191 = vmatprep.subr.bf16.mxu0 0
    %192 = vmatpush1.bf16.msra.mxu0 0
    %193 = vmatprep.subr.bf16.mxu0 0
    %194 = vmatpush1.bf16.msra.mxu0 0
    %195 = vmatprep.subr.bf16.mxu0 0
    %196 = vmatpush1.bf16.msra.mxu0 0
    %197 = vmatprep.subr.bf16.mxu0 0
    %198 = vmatpush1.bf16.msra.mxu0 0
    %199 = vmatprep.subr.bf16.mxu0 0
    %200 = vmatpush1.bf16.msra.mxu0 0
    %201 = vmatprep.subr.bf16.mxu0 0
    %202 = vmatpush1.bf16.msra.mxu0 0
    %203 = vmatprep.mubr.bf16.mxu0 0
    %204 = vmatmul.mubr.bf16.gmra.mrb[0].mxu0 %v166
    %v205 = vpop.f32.mrb[0].mxu0
    %v206 = vadd.f32 %v146, %v205
    %v207 = vpop.f32.mrb[0].mxu0
    %v208 = vpop.f32.mrb[0].mxu0
    %v209 = vadd.f32 %v146, %v208
    %v210 = vpop.f32.mrb[0].mxu0
    %211 = vmatprep.mubr.bf16.mxu0 0
    %212 = vmatmul.mubr.bf16.gmra.mrb[0].mxu0 %v169
    %v213 = vpop.f32.mrb[0].mxu0
    %v214 = vadd.f32 %v146, %v213
    %v215 = vpop.f32.mrb[0].mxu0
    %v216 = vpop.f32.mrb[0].mxu0
    %v217 = vadd.f32 %v146, %v216
    %v218 = vpop.f32.mrb[0].mxu0
    %219 = vdwg.mxu0
    %v220 = vmax.f32 %v206, 0.0
    %v221 = vmax.f32 %v209, 0.0
    %v222 = vmax.f32 %v214, 0.0
    %v223 = vmax.f32 %v217, 0.0
    %v224 = vpack.c.bf16 %v221, %v220
    %v225 = vpack.c.bf16 %v223, %v222
    %v226 = vld [vmem:[#allocation5] sm:$0xff]
    %v227 = vld [vmem:[#allocation5 + $0x8] sm:$0xf]
    %v228 = vld [vmem:[#allocation5 + $0xc] sm:$0xff]
    %v229 = vld [vmem:[#allocation5 + $0x14] sm:$0xf]
    %v230 = vld [vmem:[#allocation5 + $0x18] sm:$0xff]
    %v231 = vld [vmem:[#allocation5 + $0x20] sm:$0xf]
    %v232 = vld [vmem:[#allocation5 + $0x24] sm:$0xff]
    %v233 = vld [vmem:[#allocation5 + $0x2c] sm:$0xf]
    %v234 = vld [vmem:[#allocation5 + $0x30] sm:$0xff]
    %v235 = vld [vmem:[#allocation5 + $0x38] sm:$0xf]
    %v236 = vld [vmem:[#allocation5 + $0x3c] sm:$0xff]
    %v237 = vld [vmem:[#allocation5 + $0x44] sm:$0xf]
    %v238 = vld [vmem:[#allocation5 + $0x48] sm:$0xff]
    %v239 = vld [vmem:[#allocation5 + $0x50] sm:$0xf]
    %v240 = vld [vmem:[#allocation5 + $0x54] sm:$0xff]
    %v241 = vld [vmem:[#allocation5 + $0x5c] sm:$0xf]
    %v242 = vld [vmem:[#allocation5 + $0x60] sm:$0xff]
    %v243 = vld [vmem:[#allocation5 + $0x68] sm:$0xf]
    %v244 = vld [vmem:[#allocation5 + $0x6c] sm:$0xff]
    %v245 = vld [vmem:[#allocation5 + $0x74] sm:$0xf]
    %v246 = vld [vmem:[#allocation5 + $0x78] sm:$0xff]
    %v247 = vld [vmem:[#allocation5 + $0x80] sm:$0xf]
    %v248 = vld [vmem:[#allocation5 + $0x84] sm:$0xff]
    %v249 = vld [vmem:[#allocation5 + $0x8c] sm:$0xf]
    %v250 = vld [vmem:[#allocation5 + $0x90] sm:$0xff]
    %v251 = vld [vmem:[#allocation5 + $0x98] sm:$0xf]
    %v252 = vld [vmem:[#allocation5 + $0x9c] sm:$0xff]
    %v253 = vld [vmem:[#allocation5 + $0xa4] sm:$0xf]
    %v254 = vld [vmem:[#allocation5 + $0xa8] sm:$0xff]
    %v255 = vld [vmem:[#allocation5 + $0xb0] sm:$0xf]
    %v256 = vld [vmem:[#allocation5 + $0xb4] sm:$0xff]
    %v257 = vld [vmem:[#allocation5 + $0xbc] sm:$0xf]
    %v290 = vunpack.c.l.b16 %v226
    %v291 = vunpack.c.h.b16 %v226
    %v292 = vunpack.c.l.b16 %v227
    %v293 = vunpack.c.l.b16 %v228
    %v294 = vunpack.c.h.b16 %v228
    %v295 = vunpack.c.l.b16 %v229
    %v296 = vunpack.c.l.b16 %v230
    %v297 = vunpack.c.h.b16 %v230
    %v298 = vunpack.c.l.b16 %v231
    %v299 = vunpack.c.l.b16 %v232
    %v300 = vunpack.c.h.b16 %v232
    %v301 = vunpack.c.l.b16 %v233
    %v302 = vunpack.c.l.b16 %v234
    %v303 = vunpack.c.h.b16 %v234
    %v304 = vunpack.c.l.b16 %v235
    %v305 = vunpack.c.l.b16 %v236
    %v306 = vunpack.c.h.b16 %v236
    %v307 = vunpack.c.l.b16 %v237
    %v308 = vunpack.c.l.b16 %v238
    %v309 = vunpack.c.h.b16 %v238
    %v310 = vunpack.c.l.b16 %v239
    %v311 = vunpack.c.l.b16 %v240
    %v312 = vunpack.c.h.b16 %v240
    %v313 = vunpack.c.l.b16 %v241
    %v314 = vunpack.c.l.b16 %v242
    %v315 = vunpack.c.h.b16 %v242
    %v316 = vunpack.c.l.b16 %v243
    %v317 = vunpack.c.l.b16 %v244
    %v318 = vunpack.c.h.b16 %v244
    %v319 = vunpack.c.l.b16 %v245
    %v320 = vunpack.c.l.b16 %v246
    %v321 = vunpack.c.h.b16 %v246
    %v322 = vunpack.c.l.b16 %v247
    %v323 = vunpack.c.l.b16 %v248
    %v324 = vunpack.c.h.b16 %v248
    %v325 = vunpack.c.l.b16 %v249
    %v326 = vunpack.c.l.b16 %v250
    %v327 = vunpack.c.h.b16 %v250
    %v328 = vunpack.c.l.b16 %v251
    %v329 = vunpack.c.l.b16 %v252
    %v330 = vunpack.c.h.b16 %v252
    %v331 = vunpack.c.l.b16 %v253
    %v332 = vunpack.c.l.b16 %v254
    %v333 = vunpack.c.h.b16 %v254
    %v334 = vunpack.c.l.b16 %v255
    %v335 = vunpack.c.l.b16 %v256
    %v336 = vunpack.c.h.b16 %v256
    %v337 = vunpack.c.l.b16 %v257
    %v338 = vpack.c.b16 %v293, %v290
    %v339 = vpack.c.b16 %v294, %v291
    %v340 = vpack.c.b16 %v295, %v292
    %v341 = vpack.c.b16 %v299, %v296
    %v342 = vpack.c.b16 %v300, %v297
    %v343 = vpack.c.b16 %v301, %v298
    %v344 = vpack.c.b16 %v305, %v302
    %v345 = vpack.c.b16 %v306, %v303
    %v346 = vpack.c.b16 %v307, %v304
    %v347 = vpack.c.b16 %v311, %v308
    %v348 = vpack.c.b16 %v312, %v309
    %v349 = vpack.c.b16 %v313, %v310
    %v350 = vpack.c.b16 %v317, %v314
    %v351 = vpack.c.b16 %v318, %v315
    %v352 = vpack.c.b16 %v319, %v316
    %v353 = vpack.c.b16 %v323, %v320
    %v354 = vpack.c.b16 %v324, %v321
    %v355 = vpack.c.b16 %v325, %v322
    %v356 = vpack.c.b16 %v329, %v326
    %v357 = vpack.c.b16 %v330, %v327
    %v358 = vpack.c.b16 %v331, %v328
    %v359 = vpack.c.b16 %v335, %v332
    %v360 = vpack.c.b16 %v336, %v333
    %v361 = vpack.c.b16 %v337, %v334
    %386 = vmatprep.subr.bf16.mxu0 %v339
    %387 = vmatpush1.bf16.msra.mxu0 %v338
    %388 = vmatprep.subr.bf16.mxu0 %v342
    %389 = vmatpush1.bf16.msra.mxu0 %v341
    %390 = vmatprep.subr.bf16.mxu0 %v345
    %391 = vmatpush1.bf16.msra.mxu0 %v344
    %392 = vmatprep.subr.bf16.mxu0 %v348
    %393 = vmatpush1.bf16.msra.mxu0 %v347
    %394 = vmatprep.subr.bf16.mxu0 %v351
    %395 = vmatpush1.bf16.msra.mxu0 %v350
    %396 = vmatprep.subr.bf16.mxu0 %v354
    %397 = vmatpush1.bf16.msra.mxu0 %v353
    %398 = vmatprep.subr.bf16.mxu0 %v357
    %399 = vmatpush1.bf16.msra.mxu0 %v356
    %400 = vmatprep.subr.bf16.mxu0 %v360
    %401 = vmatpush1.bf16.msra.mxu0 %v359
    %402 = vmatprep.subr.bf16.mxu0 0
    %403 = vmatpush1.bf16.msra.mxu0 0
    %404 = vmatprep.subr.bf16.mxu0 0
    %405 = vmatpush1.bf16.msra.mxu0 0
    %406 = vmatprep.subr.bf16.mxu0 0
    %407 = vmatpush1.bf16.msra.mxu0 0
    %408 = vmatprep.subr.bf16.mxu0 0
    %409 = vmatpush1.bf16.msra.mxu0 0
    %410 = vmatprep.subr.bf16.mxu0 0
    %411 = vmatpush1.bf16.msra.mxu0 0
    %412 = vmatprep.subr.bf16.mxu0 0
    %413 = vmatpush1.bf16.msra.mxu0 0
    %414 = vmatprep.subr.bf16.mxu0 0
    %415 = vmatpush1.bf16.msra.mxu0 0
    %416 = vmatprep.subr.bf16.mxu0 0
    %417 = vmatpush1.bf16.msra.mxu0 0
    %418 = vmatprep.mubr.bf16.mxu0 0
    %419 = vmatmul.mubr.bf16.gmra.mrb[0].mxu0 %v224
    %v420 = vpop.f32.mrb[0].mxu0
    %v421 = vadd.f32 0.0, %v420
    %v422 = vpop.f32.mrb[0].mxu0
    %v423 = vadd.f32 0.0, %v422
    %v424 = vpop.f32.mrb[0].mxu0
    %v425 = vadd.f32 0.0, %v424
    %v426 = vpop.f32.mrb[0].mxu0
    %v427 = vadd.f32 0.0, %v426
    %428 = vmatprep.mubr.bf16.mxu0 0
    %429 = vmatmul.mubr.bf16.gmra.mrb[0].mxu0 %v225
    %v430 = vpop.f32.mrb[0].mxu0
    %v431 = vadd.f32 0.0, %v430
    %v432 = vpop.f32.mrb[0].mxu0
    %v433 = vadd.f32 0.0, %v432
    %v434 = vpop.f32.mrb[0].mxu0
    %v435 = vadd.f32 0.0, %v434
    %v436 = vpop.f32.mrb[0].mxu0
    %v437 = vadd.f32 0.0, %v436
    %438 = vdwg.mxu0
    %439 = vmatprep.subr.bf16.mxu0 0
    %440 = vmatpush1.bf16.msra.mxu0 %v340
    %441 = vmatprep.subr.bf16.mxu0 0
    %442 = vmatpush1.bf16.msra.mxu0 %v343
    %443 = vmatprep.subr.bf16.mxu0 0
    %444 = vmatpush1.bf16.msra.mxu0 %v346
    %445 = vmatprep.subr.bf16.mxu0 0
    %446 = vmatpush1.bf16.msra.mxu0 %v349
    %447 = vmatprep.subr.bf16.mxu0 0
    %448 = vmatpush1.bf16.msra.mxu0 %v352
    %449 = vmatprep.subr.bf16.mxu0 0
    %450 = vmatpush1.bf16.msra.mxu0 %v355
    %451 = vmatprep.subr.bf16.mxu0 0
    %452 = vmatpush1.bf16.msra.mxu0 %v358
    %453 = vmatprep.subr.bf16.mxu0 0
    %454 = vmatpush1.bf16.msra.mxu0 %v361
    %455 = vmatprep.subr.bf16.mxu0 0
    %456 = vmatpush1.bf16.msra.mxu0 0
    %457 = vmatprep.subr.bf16.mxu0 0
    %458 = vmatpush1.bf16.msra.mxu0 0
    %459 = vmatprep.subr.bf16.mxu0 0
    %460 = vmatpush1.bf16.msra.mxu0 0
    %461 = vmatprep.subr.bf16.mxu0 0
    %462 = vmatpush1.bf16.msra.mxu0 0
    %463 = vmatprep.subr.bf16.mxu0 0
    %464 = vmatpush1.bf16.msra.mxu0 0
    %465 = vmatprep.subr.bf16.mxu0 0
    %466 = vmatpush1.bf16.msra.mxu0 0
    %467 = vmatprep.subr.bf16.mxu0 0
    %468 = vmatpush1.bf16.msra.mxu0 0
    %469 = vmatprep.subr.bf16.mxu0 0
    %470 = vmatpush1.bf16.msra.mxu0 0
    %471 = vmatprep.mubr.bf16.mxu0 0
    %472 = vmatmul.mubr.bf16.gmra.mrb[0].mxu0 %v224
    %v473 = vpop.f32.mrb[0].mxu0
    %v474 = vadd.f32 0.0, %v473
    %v475 = vpop.f32.mrb[0].mxu0
    %v476 = vpop.f32.mrb[0].mxu0
    %v477 = vadd.f32 0.0, %v476
    %v478 = vpop.f32.mrb[0].mxu0
    %479 = vmatprep.mubr.bf16.mxu0 0
    %480 = vmatmul.mubr.bf16.gmra.mrb[0].mxu0 %v225
    %v481 = vpop.f32.mrb[0].mxu0
    %v482 = vadd.f32 0.0, %v481
    %v483 = vpop.f32.mrb[0].mxu0
    %v484 = vpop.f32.mrb[0].mxu0
    %v485 = vadd.f32 0.0, %v484
    %v486 = vpop.f32.mrb[0].mxu0
    %487 = vdwg.mxu0
    %v488 = vpack.c.bf16 %v425, %v421
    %v489 = vpack.c.bf16 %v427, %v423
    %v490 = vpack.c.bf16 %v477, %v474
    %v491 = vpack.c.bf16 %v435, %v431
    %v492 = vpack.c.bf16 %v437, %v433
    %v493 = vpack.c.bf16 %v485, %v482
    %v494 = vld [vmem:[%s5] sm:$0xf]
    %v495 = vld [vmem:[%s5 + $0x4] sm:$0xf]
    %s496 = scalar_lea.vmem %s5, 8
    %v497 = vld [vmem:[%s496] sm:$0xf]
    %v498 = vld [vmem:[%s496 + $0x4] sm:$0xf]
    %v501 = vunpack.c.l.b16 %v497
    %v502 = vunpack.c.l.b16 %v498
    %v503 = vpack.c.b16 %v502, %v501
    %vm504 = vcmask 261120
    %v506 = vsel %vm504, %v503, 0
    %508 = vmatprep.subr.bf16.mxu0 0
    %509 = vmatpush1.bf16.msra.mxu0 %v489
    %510 = vmatprep.subr.bf16.mxu0 0
    %511 = vmatpush1.bf16.msra.mxu0 %v492
    %512 = vmatprep.subr.bf16.mxu0 0
    %513 = vmatpush1.bf16.msra.mxu0 0
    %514 = vmatprep.subr.bf16.mxu0 0
    %515 = vmatpush1.bf16.msra.mxu0 0
    %516 = vmatprep.subr.bf16.mxu0 0
    %517 = vmatpush1.bf16.msra.mxu0 0
    %518 = vmatprep.subr.bf16.mxu0 0
    %519 = vmatpush1.bf16.msra.mxu0 0
    %520 = vmatprep.subr.bf16.mxu0 0
    %521 = vmatpush1.bf16.msra.mxu0 0
    %522 = vmatprep.subr.bf16.mxu0 0
    %523 = vmatpush1.bf16.msra.mxu0 0
    %524 = vmatprep.subr.bf16.mxu0 0
    %525 = vmatpush1.bf16.msra.mxu0 0
    %526 = vmatprep.subr.bf16.mxu0 0
    %527 = vmatpush1.bf16.msra.mxu0 0
    %528 = vmatprep.subr.bf16.mxu0 0
    %529 = vmatpush1.bf16.msra.mxu0 0
    %530 = vmatprep.subr.bf16.mxu0 0
    %531 = vmatpush1.bf16.msra.mxu0 0
    %532 = vmatprep.subr.bf16.mxu0 0
    %533 = vmatpush1.bf16.msra.mxu0 0
    %534 = vmatprep.subr.bf16.mxu0 0
    %535 = vmatpush1.bf16.msra.mxu0 0
    %536 = vmatprep.subr.bf16.mxu0 0
    %537 = vmatpush1.bf16.msra.mxu0 0
    %538 = vmatprep.subr.bf16.mxu0 0
    %539 = vmatpush1.bf16.msra.mxu0 0
    %540 = vmatprep.mubr.bf16.mxu0 0
    %541 = vmatmul.mubr.bf16.gmra.mrb[0].mxu0 %v506
    %v542 = vpop.f32.mrb[0].mxu0
    %v543 = vadd.f32 0.0, %v542
    %v544 = vpop.f32.mrb[0].mxu0
    %v545 = vpop.f32.mrb[0].mxu0
    %v546 = vadd.f32 0.0, %v545
    %v547 = vpop.f32.mrb[0].mxu0
    %548 = vdwg.mxu0
    %v551 = vunpack.c.l.b16 %v494
    %v552 = vunpack.c.l.b16 %v495
    %v553 = vpack.c.b16 %v552, %v551
    %v555 = vsel %vm504, %v553, 0
    %557 = vmatprep.subr.bf16.mxu0 0
    %558 = vmatpush1.bf16.msra.mxu0 %v488
    %559 = vmatprep.subr.bf16.mxu0 0
    %560 = vmatpush1.bf16.msra.mxu0 %v491
    %561 = vmatprep.subr.bf16.mxu0 0
    %562 = vmatpush1.bf16.msra.mxu0 0
    %563 = vmatprep.subr.bf16.mxu0 0
    %564 = vmatpush1.bf16.msra.mxu0 0
    %565 = vmatprep.subr.bf16.mxu0 0
    %566 = vmatpush1.bf16.msra.mxu0 0
    %567 = vmatprep.subr.bf16.mxu0 0
    %568 = vmatpush1.bf16.msra.mxu0 0
    %569 = vmatprep.subr.bf16.mxu0 0
    %570 = vmatpush1.bf16.msra.mxu0 0
    %571 = vmatprep.subr.bf16.mxu0 0
    %572 = vmatpush1.bf16.msra.mxu0 0
    %573 = vmatprep.subr.bf16.mxu0 0
    %574 = vmatpush1.bf16.msra.mxu0 0
    %575 = vmatprep.subr.bf16.mxu0 0
    %576 = vmatpush1.bf16.msra.mxu0 0
    %577 = vmatprep.subr.bf16.mxu0 0
    %578 = vmatpush1.bf16.msra.mxu0 0
    %579 = vmatprep.subr.bf16.mxu0 0
    %580 = vmatpush1.bf16.msra.mxu0 0
    %581 = vmatprep.subr.bf16.mxu0 0
    %582 = vmatpush1.bf16.msra.mxu0 0
    %583 = vmatprep.subr.bf16.mxu0 0
    %584 = vmatpush1.bf16.msra.mxu0 0
    %585 = vmatprep.subr.bf16.mxu0 0
    %586 = vmatpush1.bf16.msra.mxu0 0
    %587 = vmatprep.subr.bf16.mxu0 0
    %588 = vmatpush1.bf16.msra.mxu0 0
    %589 = vmatprep.mubr.bf16.mxu0 0
    %590 = vmatmul.mubr.bf16.gmra.mrb[0].mxu0 %v555
    %v591 = vpop.f32.mrb[0].mxu0
    %v592 = vadd.f32 %v543, %v591
    %v593 = vpop.f32.mrb[0].mxu0
    %v594 = vpop.f32.mrb[0].mxu0
    %v595 = vadd.f32 %v546, %v594
    %v596 = vpop.f32.mrb[0].mxu0
    %597 = vdwg.mxu0
    %s598 = scalar_lea.vmem %s5, 16
    %v599 = vld [vmem:[%s598] sm:$0xf]
    %v600 = vld [vmem:[%s598 + $0x4] sm:$0xf]
    %v603 = vunpack.c.l.b16 %v599
    %v604 = vunpack.c.l.b16 %v600
    %v605 = vpack.c.b16 %v604, %v603
    %v607 = vsel %vm504, %v605, 0
    %609 = vmatprep.subr.bf16.mxu0 0
    %610 = vmatpush1.bf16.msra.mxu0 %v490
    %611 = vmatprep.subr.bf16.mxu0 0
    %612 = vmatpush1.bf16.msra.mxu0 %v493
    %613 = vmatprep.subr.bf16.mxu0 0
    %614 = vmatpush1.bf16.msra.mxu0 0
    %615 = vmatprep.subr.bf16.mxu0 0
    %616 = vmatpush1.bf16.msra.mxu0 0
    %617 = vmatprep.subr.bf16.mxu0 0
    %618 = vmatpush1.bf16.msra.mxu0 0
    %619 = vmatprep.subr.bf16.mxu0 0
    %620 = vmatpush1.bf16.msra.mxu0 0
    %621 = vmatprep.subr.bf16.mxu0 0
    %622 = vmatpush1.bf16.msra.mxu0 0
    %623 = vmatprep.subr.bf16.mxu0 0
    %624 = vmatpush1.bf16.msra.mxu0 0
    %625 = vmatprep.subr.bf16.mxu0 0
    %626 = vmatpush1.bf16.msra.mxu0 0
    %627 = vmatprep.subr.bf16.mxu0 0
    %628 = vmatpush1.bf16.msra.mxu0 0
    %629 = vmatprep.subr.bf16.mxu0 0
    %630 = vmatpush1.bf16.msra.mxu0 0
    %631 = vmatprep.subr.bf16.mxu0 0
    %632 = vmatpush1.bf16.msra.mxu0 0
    %633 = vmatprep.subr.bf16.mxu0 0
    %634 = vmatpush1.bf16.msra.mxu0 0
    %635 = vmatprep.subr.bf16.mxu0 0
    %636 = vmatpush1.bf16.msra.mxu0 0
    %637 = vmatprep.subr.bf16.mxu0 0
    %638 = vmatpush1.bf16.msra.mxu0 0
    %639 = vmatprep.subr.bf16.mxu0 0
    %640 = vmatpush1.bf16.msra.mxu0 0
    %641 = vmatprep.mubr.bf16.mxu0 0
    %642 = vmatmul.mubr.bf16.gmra.mrb[0].mxu0 %v607
    %v643 = vpop.f32.mrb[0].mxu0
    %v644 = vadd.f32 0.0, %v643
    %v645 = vpop.f32.mrb[0].mxu0
    %v646 = vpop.f32.mrb[0].mxu0
    %v647 = vadd.f32 0.0, %v646
    %v648 = vpop.f32.mrb[0].mxu0
    %649 = vdwg.mxu0
    %v650 = vadd.f32 %v592, %v644
    %v651 = vadd.f32 %v595, %v647
    %v652 = vld [vmem:[#allocation7] sm:$0x1]
    %v654 = vlaneseq
    %v655 = vshrl.u32 %v654, 7
    %v656 = vsub.s32 0, %v655
    %v657 = vrot.slane %v652, %v656
    %v659 = vadd.f32 %v650, %v657
    %v660 = vadd.f32 %v651, %v657
    %v661 = vmax.f32 %v659, 0.0
    %v662 = vmax.f32 %v660, 0.0
    %v663 = vpack.c.bf16 %v662, %v661
    %v664 = vld [vmem:[#allocation8] sm:$0xff]
    %v665 = vld [vmem:[#allocation8 + $0x8] sm:$0xf]
    %v666 = vld [vmem:[#allocation8 + $0xc] sm:$0xff]
    %v667 = vld [vmem:[#allocation8 + $0x14] sm:$0xf]
    %v668 = vld [vmem:[#allocation8 + $0x18] sm:$0xff]
    %v669 = vld [vmem:[#allocation8 + $0x20] sm:$0xf]
    %v670 = vld [vmem:[#allocation8 + $0x24] sm:$0xff]
    %v671 = vld [vmem:[#allocation8 + $0x2c] sm:$0xf]
    %v672 = vld [vmem:[#allocation8 + $0x30] sm:$0xff]
    %v673 = vld [vmem:[#allocation8 + $0x38] sm:$0xf]
    %v674 = vld [vmem:[#allocation8 + $0x3c] sm:$0xff]
    %v675 = vld [vmem:[#allocation8 + $0x44] sm:$0xf]
    %v676 = vld [vmem:[#allocation8 + $0x48] sm:$0xff]
    %v677 = vld [vmem:[#allocation8 + $0x50] sm:$0xf]
    %v678 = vld [vmem:[#allocation8 + $0x54] sm:$0xff]
    %v679 = vld [vmem:[#allocation8 + $0x5c] sm:$0xf]
    %v680 = vld [vmem:[#allocation8 + $0x60] sm:$0xff]
    %v681 = vld [vmem:[#allocation8 + $0x68] sm:$0xf]
    %v682 = vld [vmem:[#allocation8 + $0x6c] sm:$0xff]
    %v683 = vld [vmem:[#allocation8 + $0x74] sm:$0xf]
    %v684 = vld [vmem:[#allocation8 + $0x78] sm:$0xff]
    %v685 = vld [vmem:[#allocation8 + $0x80] sm:$0xf]
    %v686 = vld [vmem:[#allocation8 + $0x84] sm:$0xff]
    %v687 = vld [vmem:[#allocation8 + $0x8c] sm:$0xf]
    %v688 = vld [vmem:[#allocation8 + $0x90] sm:$0xff]
    %v689 = vld [vmem:[#allocation8 + $0x98] sm:$0xf]
    %v690 = vld [vmem:[#allocation8 + $0x9c] sm:$0xff]
    %v691 = vld [vmem:[#allocation8 + $0xa4] sm:$0xf]
    %v692 = vld [vmem:[#allocation8 + $0xa8] sm:$0xff]
    %v693 = vld [vmem:[#allocation8 + $0xb0] sm:$0xf]
    %v694 = vld [vmem:[#allocation8 + $0xb4] sm:$0xff]
    %v695 = vld [vmem:[#allocation8 + $0xbc] sm:$0xf]
    %v728 = vunpack.c.l.b16 %v664
    %v729 = vunpack.c.h.b16 %v664
    %v730 = vunpack.c.l.b16 %v665
    %v731 = vunpack.c.l.b16 %v666
    %v732 = vunpack.c.h.b16 %v666
    %v733 = vunpack.c.l.b16 %v667
    %v734 = vunpack.c.l.b16 %v668
    %v735 = vunpack.c.h.b16 %v668
    %v736 = vunpack.c.l.b16 %v669
    %v737 = vunpack.c.l.b16 %v670
    %v738 = vunpack.c.h.b16 %v670
    %v739 = vunpack.c.l.b16 %v671
    %v740 = vunpack.c.l.b16 %v672
    %v741 = vunpack.c.h.b16 %v672
    %v742 = vunpack.c.l.b16 %v673
    %v743 = vunpack.c.l.b16 %v674
    %v744 = vunpack.c.h.b16 %v674
    %v745 = vunpack.c.l.b16 %v675
    %v746 = vunpack.c.l.b16 %v676
    %v747 = vunpack.c.h.b16 %v676
    %v748 = vunpack.c.l.b16 %v677
    %v749 = vunpack.c.l.b16 %v678
    %v750 = vunpack.c.h.b16 %v678
    %v751 = vunpack.c.l.b16 %v679
    %v752 = vunpack.c.l.b16 %v680
    %v753 = vunpack.c.h.b16 %v680
    %v754 = vunpack.c.l.b16 %v681
    %v755 = vunpack.c.l.b16 %v682
    %v756 = vunpack.c.h.b16 %v682
    %v757 = vunpack.c.l.b16 %v683
    %v758 = vunpack.c.l.b16 %v684
    %v759 = vunpack.c.h.b16 %v684
    %v760 = vunpack.c.l.b16 %v685
    %v761 = vunpack.c.l.b16 %v686
    %v762 = vunpack.c.h.b16 %v686
    %v763 = vunpack.c.l.b16 %v687
    %v764 = vunpack.c.l.b16 %v688
    %v765 = vunpack.c.h.b16 %v688
    %v766 = vunpack.c.l.b16 %v689
    %v767 = vunpack.c.l.b16 %v690
    %v768 = vunpack.c.h.b16 %v690
    %v769 = vunpack.c.l.b16 %v691
    %v770 = vunpack.c.l.b16 %v692
    %v771 = vunpack.c.h.b16 %v692
    %v772 = vunpack.c.l.b16 %v693
    %v773 = vunpack.c.l.b16 %v694
    %v774 = vunpack.c.h.b16 %v694
    %v775 = vunpack.c.l.b16 %v695
    %v776 = vpack.c.b16 %v731, %v728
    %v777 = vpack.c.b16 %v732, %v729
    %v778 = vpack.c.b16 %v733, %v730
    %v779 = vpack.c.b16 %v737, %v734
    %v780 = vpack.c.b16 %v738, %v735
    %v781 = vpack.c.b16 %v739, %v736
    %v782 = vpack.c.b16 %v743, %v740
    %v783 = vpack.c.b16 %v744, %v741
    %v784 = vpack.c.b16 %v745, %v742
    %v785 = vpack.c.b16 %v749, %v746
    %v786 = vpack.c.b16 %v750, %v747
    %v787 = vpack.c.b16 %v751, %v748
    %v788 = vpack.c.b16 %v755, %v752
    %v789 = vpack.c.b16 %v756, %v753
    %v790 = vpack.c.b16 %v757, %v754
    %v791 = vpack.c.b16 %v761, %v758
    %v792 = vpack.c.b16 %v762, %v759
    %v793 = vpack.c.b16 %v763, %v760
    %v794 = vpack.c.b16 %v767, %v764
    %v795 = vpack.c.b16 %v768, %v765
    %v796 = vpack.c.b16 %v769, %v766
    %v797 = vpack.c.b16 %v773, %v770
    %v798 = vpack.c.b16 %v774, %v771
    %v799 = vpack.c.b16 %v775, %v772
    %824 = vmatprep.subr.bf16.mxu0 %v777
    %825 = vmatpush1.bf16.msra.mxu0 %v776
    %826 = vmatprep.subr.bf16.mxu0 %v780
    %827 = vmatpush1.bf16.msra.mxu0 %v779
    %828 = vmatprep.subr.bf16.mxu0 %v783
    %829 = vmatpush1.bf16.msra.mxu0 %v782
    %830 = vmatprep.subr.bf16.mxu0 %v786
    %831 = vmatpush1.bf16.msra.mxu0 %v785
    %832 = vmatprep.subr.bf16.mxu0 %v789
    %833 = vmatpush1.bf16.msra.mxu0 %v788
    %834 = vmatprep.subr.bf16.mxu0 %v792
    %835 = vmatpush1.bf16.msra.mxu0 %v791
    %836 = vmatprep.subr.bf16.mxu0 %v795
    %837 = vmatpush1.bf16.msra.mxu0 %v794
    %838 = vmatprep.subr.bf16.mxu0 %v798
    %839 = vmatpush1.bf16.msra.mxu0 %v797
    %840 = vmatprep.subr.bf16.mxu0 0
    %841 = vmatpush1.bf16.msra.mxu0 0
    %842 = vmatprep.subr.bf16.mxu0 0
    %843 = vmatpush1.bf16.msra.mxu0 0
    %844 = vmatprep.subr.bf16.mxu0 0
    %845 = vmatpush1.bf16.msra.mxu0 0
    %846 = vmatprep.subr.bf16.mxu0 0
    %847 = vmatpush1.bf16.msra.mxu0 0
    %848 = vmatprep.subr.bf16.mxu0 0
    %849 = vmatpush1.bf16.msra.mxu0 0
    %850 = vmatprep.subr.bf16.mxu0 0
    %851 = vmatpush1.bf16.msra.mxu0 0
    %852 = vmatprep.subr.bf16.mxu0 0
    %853 = vmatpush1.bf16.msra.mxu0 0
    %854 = vmatprep.subr.bf16.mxu0 0
    %855 = vmatpush1.bf16.msra.mxu0 0
    %856 = vmatprep.mubr.bf16.mxu0 0
    %857 = vmatmul.mubr.bf16.gmra.mrb[0].mxu0 %v663
    %v858 = vpop.f32.mrb[0].mxu0
    %v859 = vadd.f32 0.0, %v858
    %v860 = vpop.f32.mrb[0].mxu0
    %v861 = vadd.f32 0.0, %v860
    %v862 = vpop.f32.mrb[0].mxu0
    %v863 = vadd.f32 0.0, %v862
    %v864 = vpop.f32.mrb[0].mxu0
    %v865 = vadd.f32 0.0, %v864
    %866 = vdwg.mxu0
    %867 = vmatprep.subr.bf16.mxu0 0
    %868 = vmatpush1.bf16.msra.mxu0 %v778
    %869 = vmatprep.subr.bf16.mxu0 0
    %870 = vmatpush1.bf16.msra.mxu0 %v781
    %871 = vmatprep.subr.bf16.mxu0 0
    %872 = vmatpush1.bf16.msra.mxu0 %v784
    %873 = vmatprep.subr.bf16.mxu0 0
    %874 = vmatpush1.bf16.msra.mxu0 %v787
    %875 = vmatprep.subr.bf16.mxu0 0
    %876 = vmatpush1.bf16.msra.mxu0 %v790
    %877 = vmatprep.subr.bf16.mxu0 0
    %878 = vmatpush1.bf16.msra.mxu0 %v793
    %879 = vmatprep.subr.bf16.mxu0 0
    %880 = vmatpush1.bf16.msra.mxu0 %v796
    %881 = vmatprep.subr.bf16.mxu0 0
    %882 = vmatpush1.bf16.msra.mxu0 %v799
    %883 = vmatprep.subr.bf16.mxu0 0
    %884 = vmatpush1.bf16.msra.mxu0 0
    %885 = vmatprep.subr.bf16.mxu0 0
    %886 = vmatpush1.bf16.msra.mxu0 0
    %887 = vmatprep.subr.bf16.mxu0 0
    %888 = vmatpush1.bf16.msra.mxu0 0
    %889 = vmatprep.subr.bf16.mxu0 0
    %890 = vmatpush1.bf16.msra.mxu0 0
    %891 = vmatprep.subr.bf16.mxu0 0
    %892 = vmatpush1.bf16.msra.mxu0 0
    %893 = vmatprep.subr.bf16.mxu0 0
    %894 = vmatpush1.bf16.msra.mxu0 0
    %895 = vmatprep.subr.bf16.mxu0 0
    %896 = vmatpush1.bf16.msra.mxu0 0
    %897 = vmatprep.subr.bf16.mxu0 0
    %898 = vmatpush1.bf16.msra.mxu0 0
    %899 = vmatprep.mubr.bf16.mxu0 0
    %900 = vmatmul.mubr.bf16.gmra.mrb[0].mxu0 %v663
    %v901 = vpop.f32.mrb[0].mxu0
    %v902 = vadd.f32 0.0, %v901
    %v903 = vpop.f32.mrb[0].mxu0
    %v904 = vpop.f32.mrb[0].mxu0
    %v905 = vadd.f32 0.0, %v904
    %v906 = vpop.f32.mrb[0].mxu0
    %907 = vdwg.mxu0
    %v908 = vpack.c.bf16 %v863, %v859
    %v909 = vpack.c.bf16 %v865, %v861
    %v910 = vpack.c.bf16 %v905, %v902
    %v911 = vld [vmem:[%s8] sm:$0xf]
    %s912 = scalar_lea.vmem %s8, 4
    %v913 = vld [vmem:[%s912] sm:$0xf]
    %v915 = vsel %vm164, %v913, 0
    %917 = vmatprep.subr.bf16.mxu0 0
    %918 = vmatpush1.bf16.msra.mxu0 %v909
    %919 = vmatprep.subr.bf16.mxu0 0
    %920 = vmatpush1.bf16.msra.mxu0 0
    %921 = vmatprep.subr.bf16.mxu0 0
    %922 = vmatpush1.bf16.msra.mxu0 0
    %923 = vmatprep.subr.bf16.mxu0 0
    %924 = vmatpush1.bf16.msra.mxu0 0
    %925 = vmatprep.subr.bf16.mxu0 0
    %926 = vmatpush1.bf16.msra.mxu0 0
    %927 = vmatprep.subr.bf16.mxu0 0
    %928 = vmatpush1.bf16.msra.mxu0 0
    %929 = vmatprep.subr.bf16.mxu0 0
    %930 = vmatpush1.bf16.msra.mxu0 0
    %931 = vmatprep.subr.bf16.mxu0 0
    %932 = vmatpush1.bf16.msra.mxu0 0
    %933 = vmatprep.subr.bf16.mxu0 0
    %934 = vmatpush1.bf16.msra.mxu0 0
    %935 = vmatprep.subr.bf16.mxu0 0
    %936 = vmatpush1.bf16.msra.mxu0 0
    %937 = vmatprep.subr.bf16.mxu0 0
    %938 = vmatpush1.bf16.msra.mxu0 0
    %939 = vmatprep.subr.bf16.mxu0 0
    %940 = vmatpush1.bf16.msra.mxu0 0
    %941 = vmatprep.subr.bf16.mxu0 0
    %942 = vmatpush1.bf16.msra.mxu0 0
    %943 = vmatprep.subr.bf16.mxu0 0
    %944 = vmatpush1.bf16.msra.mxu0 0
    %945 = vmatprep.subr.bf16.mxu0 0
    %946 = vmatpush1.bf16.msra.mxu0 0
    %947 = vmatprep.subr.bf16.mxu0 0
    %948 = vmatpush1.bf16.msra.mxu0 0
    %949 = vmatprep.mubr.bf16.mxu0 0
    %950 = vmatmul.mubr.bf16.gmra.mrb[0].mxu0 %v915
    %v951 = vpop.f32.mrb[0].mxu0
    %v952 = vadd.f32 0.0, %v951
    %v953 = vpop.f32.mrb[0].mxu0
    %v954 = vpop.f32.mrb[0].mxu0
    %v955 = vpop.f32.mrb[0].mxu0
    %956 = vdwg.mxu0
    %v958 = vsel %vm164, %v911, 0
    %960 = vmatprep.subr.bf16.mxu0 0
    %961 = vmatpush1.bf16.msra.mxu0 %v908
    %962 = vmatprep.subr.bf16.mxu0 0
    %963 = vmatpush1.bf16.msra.mxu0 0
    %964 = vmatprep.subr.bf16.mxu0 0
    %965 = vmatpush1.bf16.msra.mxu0 0
    %966 = vmatprep.subr.bf16.mxu0 0
    %967 = vmatpush1.bf16.msra.mxu0 0
    %968 = vmatprep.subr.bf16.mxu0 0
    %969 = vmatpush1.bf16.msra.mxu0 0
    %970 = vmatprep.subr.bf16.mxu0 0
    %971 = vmatpush1.bf16.msra.mxu0 0
    %972 = vmatprep.subr.bf16.mxu0 0
    %973 = vmatpush1.bf16.msra.mxu0 0
    %974 = vmatprep.subr.bf16.mxu0 0
    %975 = vmatpush1.bf16.msra.mxu0 0
    %976 = vmatprep.subr.bf16.mxu0 0
    %977 = vmatpush1.bf16.msra.mxu0 0
    %978 = vmatprep.subr.bf16.mxu0 0
    %979 = vmatpush1.bf16.msra.mxu0 0
    %980 = vmatprep.subr.bf16.mxu0 0
    %981 = vmatpush1.bf16.msra.mxu0 0
    %982 = vmatprep.subr.bf16.mxu0 0
    %983 = vmatpush1.bf16.msra.mxu0 0
    %984 = vmatprep.subr.bf16.mxu0 0
    %985 = vmatpush1.bf16.msra.mxu0 0
    %986 = vmatprep.subr.bf16.mxu0 0
    %987 = vmatpush1.bf16.msra.mxu0 0
    %988 = vmatprep.subr.bf16.mxu0 0
    %989 = vmatpush1.bf16.msra.mxu0 0
    %990 = vmatprep.subr.bf16.mxu0 0
    %991 = vmatpush1.bf16.msra.mxu0 0
    %992 = vmatprep.mubr.bf16.mxu0 0
    %993 = vmatmul.mubr.bf16.gmra.mrb[0].mxu0 %v958
    %v994 = vpop.f32.mrb[0].mxu0
    %v995 = vadd.f32 %v952, %v994
    %v996 = vpop.f32.mrb[0].mxu0
    %v997 = vpop.f32.mrb[0].mxu0
    %v998 = vpop.f32.mrb[0].mxu0
    %999 = vdwg.mxu0
    %s1000 = scalar_lea.vmem %s8, 8
    %v1001 = vld [vmem:[%s1000] sm:$0xf]
    %v1003 = vsel %vm164, %v1001, 0
    %1005 = vmatprep.subr.bf16.mxu0 0
    %1006 = vmatpush1.bf16.msra.mxu0 %v910
    %1007 = vmatprep.subr.bf16.mxu0 0
    %1008 = vmatpush1.bf16.msra.mxu0 0
    %1009 = vmatprep.subr.bf16.mxu0 0
    %1010 = vmatpush1.bf16.msra.mxu0 0
    %1011 = vmatprep.subr.bf16.mxu0 0
    %1012 = vmatpush1.bf16.msra.mxu0 0
    %1013 = vmatprep.subr.bf16.mxu0 0
    %1014 = vmatpush1.bf16.msra.mxu0 0
    %1015 = vmatprep.subr.bf16.mxu0 0
    %1016 = vmatpush1.bf16.msra.mxu0 0
    %1017 = vmatprep.subr.bf16.mxu0 0
    %1018 = vmatpush1.bf16.msra.mxu0 0
    %1019 = vmatprep.subr.bf16.mxu0 0
    %1020 = vmatpush1.bf16.msra.mxu0 0
    %1021 = vmatprep.subr.bf16.mxu0 0
    %1022 = vmatpush1.bf16.msra.mxu0 0
    %1023 = vmatprep.subr.bf16.mxu0 0
    %1024 = vmatpush1.bf16.msra.mxu0 0
    %1025 = vmatprep.subr.bf16.mxu0 0
    %1026 = vmatpush1.bf16.msra.mxu0 0
    %1027 = vmatprep.subr.bf16.mxu0 0
    %1028 = vmatpush1.bf16.msra.mxu0 0
    %1029 = vmatprep.subr.bf16.mxu0 0
    %1030 = vmatpush1.bf16.msra.mxu0 0
    %1031 = vmatprep.subr.bf16.mxu0 0
    %1032 = vmatpush1.bf16.msra.mxu0 0
    %1033 = vmatprep.subr.bf16.mxu0 0
    %1034 = vmatpush1.bf16.msra.mxu0 0
    %1035 = vmatprep.subr.bf16.mxu0 0
    %1036 = vmatpush1.bf16.msra.mxu0 0
    %1037 = vmatprep.mubr.bf16.mxu0 0
    %1038 = vmatmul.mubr.bf16.gmra.mrb[0].mxu0 %v1003
    %v1039 = vpop.f32.mrb[0].mxu0
    %v1040 = vadd.f32 0.0, %v1039
    %v1041 = vpop.f32.mrb[0].mxu0
    %v1042 = vpop.f32.mrb[0].mxu0
    %v1043 = vpop.f32.mrb[0].mxu0
    %1044 = vdwg.mxu0
    %v1045 = vadd.f32 %v995, %v1040
    %v1046 = vld [vmem:[#allocation10] sm:$0x1]
    %v1048 = vlaneseq
    %v1049 = vshrl.u32 %v1048, 7
    %v1050 = vsub.s32 0, %v1049
    %v1051 = vrot.slane %v1046, %v1050
    %v1053 = vadd.f32 %v1045, %v1051
    %v1054 = vmax.f32 %v1053, 0.0
    %v1055 = vpack.c.bf16 %v1054, %v1054
    %v1056 = vld [vmem:[#allocation11] sm:$0xff]
    %v1057 = vld [vmem:[#allocation11 + $0x8] sm:$0xf]
    %v1058 = vld [vmem:[#allocation11 + $0xc] sm:$0xff]
    %v1059 = vld [vmem:[#allocation11 + $0x14] sm:$0xf]
    %v1060 = vld [vmem:[#allocation11 + $0x18] sm:$0xff]
    %v1061 = vld [vmem:[#allocation11 + $0x20] sm:$0xf]
    %v1062 = vld [vmem:[#allocation11 + $0x24] sm:$0xff]
    %v1063 = vld [vmem:[#allocation11 + $0x2c] sm:$0xf]
    %v1064 = vld [vmem:[#allocation11 + $0x30] sm:$0xff]
    %v1065 = vld [vmem:[#allocation11 + $0x38] sm:$0xf]
    %v1066 = vld [vmem:[#allocation11 + $0x3c] sm:$0xff]
    %v1067 = vld [vmem:[#allocation11 + $0x44] sm:$0xf]
    %v1068 = vld [vmem:[#allocation11 + $0x48] sm:$0xff]
    %v1069 = vld [vmem:[#allocation11 + $0x50] sm:$0xf]
    %v1070 = vld [vmem:[#allocation11 + $0x54] sm:$0xff]
    %v1071 = vld [vmem:[#allocation11 + $0x5c] sm:$0xf]
    %v1072 = vld [vmem:[#allocation11 + $0x60] sm:$0xff]
    %v1073 = vld [vmem:[#allocation11 + $0x68] sm:$0xf]
    %v1074 = vld [vmem:[#allocation11 + $0x6c] sm:$0xff]
    %v1075 = vld [vmem:[#allocation11 + $0x74] sm:$0xf]
    %v1076 = vld [vmem:[#allocation11 + $0x78] sm:$0xff]
    %v1077 = vld [vmem:[#allocation11 + $0x80] sm:$0xf]
    %v1078 = vld [vmem:[#allocation11 + $0x84] sm:$0xff]
    %v1079 = vld [vmem:[#allocation11 + $0x8c] sm:$0xf]
    %v1080 = vld [vmem:[#allocation11 + $0x90] sm:$0xff]
    %v1081 = vld [vmem:[#allocation11 + $0x98] sm:$0xf]
    %v1082 = vld [vmem:[#allocation11 + $0x9c] sm:$0xff]
    %v1083 = vld [vmem:[#allocation11 + $0xa4] sm:$0xf]
    %v1084 = vld [vmem:[#allocation11 + $0xa8] sm:$0xff]
    %v1085 = vld [vmem:[#allocation11 + $0xb0] sm:$0xf]
    %v1086 = vld [vmem:[#allocation11 + $0xb4] sm:$0xff]
    %v1087 = vld [vmem:[#allocation11 + $0xbc] sm:$0xf]
    %v1120 = vunpack.c.l.b16 %v1056
    %v1121 = vunpack.c.h.b16 %v1056
    %v1122 = vunpack.c.l.b16 %v1057
    %v1123 = vunpack.c.l.b16 %v1058
    %v1124 = vunpack.c.h.b16 %v1058
    %v1125 = vunpack.c.l.b16 %v1059
    %v1126 = vunpack.c.l.b16 %v1060
    %v1127 = vunpack.c.h.b16 %v1060
    %v1128 = vunpack.c.l.b16 %v1061
    %v1129 = vunpack.c.l.b16 %v1062
    %v1130 = vunpack.c.h.b16 %v1062
    %v1131 = vunpack.c.l.b16 %v1063
    %v1132 = vunpack.c.l.b16 %v1064
    %v1133 = vunpack.c.h.b16 %v1064
    %v1134 = vunpack.c.l.b16 %v1065
    %v1135 = vunpack.c.l.b16 %v1066
    %v1136 = vunpack.c.h.b16 %v1066
    %v1137 = vunpack.c.l.b16 %v1067
    %v1138 = vunpack.c.l.b16 %v1068
    %v1139 = vunpack.c.h.b16 %v1068
    %v1140 = vunpack.c.l.b16 %v1069
    %v1141 = vunpack.c.l.b16 %v1070
    %v1142 = vunpack.c.h.b16 %v1070
    %v1143 = vunpack.c.l.b16 %v1071
    %v1144 = vunpack.c.l.b16 %v1072
    %v1145 = vunpack.c.h.b16 %v1072
    %v1146 = vunpack.c.l.b16 %v1073
    %v1147 = vunpack.c.l.b16 %v1074
    %v1148 = vunpack.c.h.b16 %v1074
    %v1149 = vunpack.c.l.b16 %v1075
    %v1150 = vunpack.c.l.b16 %v1076
    %v1151 = vunpack.c.h.b16 %v1076
    %v1152 = vunpack.c.l.b16 %v1077
    %v1153 = vunpack.c.l.b16 %v1078
    %v1154 = vunpack.c.h.b16 %v1078
    %v1155 = vunpack.c.l.b16 %v1079
    %v1156 = vunpack.c.l.b16 %v1080
    %v1157 = vunpack.c.h.b16 %v1080
    %v1158 = vunpack.c.l.b16 %v1081
    %v1159 = vunpack.c.l.b16 %v1082
    %v1160 = vunpack.c.h.b16 %v1082
    %v1161 = vunpack.c.l.b16 %v1083
    %v1162 = vunpack.c.l.b16 %v1084
    %v1163 = vunpack.c.h.b16 %v1084
    %v1164 = vunpack.c.l.b16 %v1085
    %v1165 = vunpack.c.l.b16 %v1086
    %v1166 = vunpack.c.h.b16 %v1086
    %v1167 = vunpack.c.l.b16 %v1087
    %v1168 = vpack.c.b16 %v1123, %v1120
    %v1169 = vpack.c.b16 %v1124, %v1121
    %v1170 = vpack.c.b16 %v1125, %v1122
    %v1171 = vpack.c.b16 %v1129, %v1126
    %v1172 = vpack.c.b16 %v1130, %v1127
    %v1173 = vpack.c.b16 %v1131, %v1128
    %v1174 = vpack.c.b16 %v1135, %v1132
    %v1175 = vpack.c.b16 %v1136, %v1133
    %v1176 = vpack.c.b16 %v1137, %v1134
    %v1177 = vpack.c.b16 %v1141, %v1138
    %v1178 = vpack.c.b16 %v1142, %v1139
    %v1179 = vpack.c.b16 %v1143, %v1140
    %v1180 = vpack.c.b16 %v1147, %v1144
    %v1181 = vpack.c.b16 %v1148, %v1145
    %v1182 = vpack.c.b16 %v1149, %v1146
    %v1183 = vpack.c.b16 %v1153, %v1150
    %v1184 = vpack.c.b16 %v1154, %v1151
    %v1185 = vpack.c.b16 %v1155, %v1152
    %v1186 = vpack.c.b16 %v1159, %v1156
    %v1187 = vpack.c.b16 %v1160, %v1157
    %v1188 = vpack.c.b16 %v1161, %v1158
    %v1189 = vpack.c.b16 %v1165, %v1162
    %v1190 = vpack.c.b16 %v1166, %v1163
    %v1191 = vpack.c.b16 %v1167, %v1164
    %1216 = vmatprep.subr.bf16.mxu0 %v1169
    %1217 = vmatpush1.bf16.msra.mxu0 %v1168
    %1218 = vmatprep.subr.bf16.mxu0 %v1172
    %1219 = vmatpush1.bf16.msra.mxu0 %v1171
    %1220 = vmatprep.subr.bf16.mxu0 %v1175
    %1221 = vmatpush1.bf16.msra.mxu0 %v1174
    %1222 = vmatprep.subr.bf16.mxu0 %v1178
    %1223 = vmatpush1.bf16.msra.mxu0 %v1177
    %1224 = vmatprep.subr.bf16.mxu0 %v1181
    %1225 = vmatpush1.bf16.msra.mxu0 %v1180
    %1226 = vmatprep.subr.bf16.mxu0 %v1184
    %1227 = vmatpush1.bf16.msra.mxu0 %v1183
    %1228 = vmatprep.subr.bf16.mxu0 %v1187
    %1229 = vmatpush1.bf16.msra.mxu0 %v1186
    %1230 = vmatprep.subr.bf16.mxu0 %v1190
    %1231 = vmatpush1.bf16.msra.mxu0 %v1189
    %1232 = vmatprep.subr.bf16.mxu0 0
    %1233 = vmatpush1.bf16.msra.mxu0 0
    %1234 = vmatprep.subr.bf16.mxu0 0
    %1235 = vmatpush1.bf16.msra.mxu0 0
    %1236 = vmatprep.subr.bf16.mxu0 0
    %1237 = vmatpush1.bf16.msra.mxu0 0
    %1238 = vmatprep.subr.bf16.mxu0 0
    %1239 = vmatpush1.bf16.msra.mxu0 0
    %1240 = vmatprep.subr.bf16.mxu0 0
    %1241 = vmatpush1.bf16.msra.mxu0 0
    %1242 = vmatprep.subr.bf16.mxu0 0
    %1243 = vmatpush1.bf16.msra.mxu0 0
    %1244 = vmatprep.subr.bf16.mxu0 0
    %1245 = vmatpush1.bf16.msra.mxu0 0
    %1246 = vmatprep.subr.bf16.mxu0 0
    %1247 = vmatpush1.bf16.msra.mxu0 0
    %1248 = vmatprep.mubr.bf16.mxu0 0
    %1249 = vmatmul.mubr.bf16.gmra.mrb[0].mxu0 %v1055
    %v1250 = vpop.f32.mrb[0].mxu0
    %v1251 = vadd.f32 0.0, %v1250
    %v1252 = vpop.f32.mrb[0].mxu0
    %v1253 = vadd.f32 0.0, %v1252
    %v1254 = vpop.f32.mrb[0].mxu0
    %v1255 = vpop.f32.mrb[0].mxu0
    %1256 = vdwg.mxu0
    %1257 = vmatprep.subr.bf16.mxu0 0
    %1258 = vmatpush1.bf16.msra.mxu0 %v1170
    %1259 = vmatprep.subr.bf16.mxu0 0
    %1260 = vmatpush1.bf16.msra.mxu0 %v1173
    %1261 = vmatprep.subr.bf16.mxu0 0
    %1262 = vmatpush1.bf16.msra.mxu0 %v1176
    %1263 = vmatprep.subr.bf16.mxu0 0
    %1264 = vmatpush1.bf16.msra.mxu0 %v1179
    %1265 = vmatprep.subr.bf16.mxu0 0
    %1266 = vmatpush1.bf16.msra.mxu0 %v1182
    %1267 = vmatprep.subr.bf16.mxu0 0
    %1268 = vmatpush1.bf16.msra.mxu0 %v1185
    %1269 = vmatprep.subr.bf16.mxu0 0
    %1270 = vmatpush1.bf16.msra.mxu0 %v1188
    %1271 = vmatprep.subr.bf16.mxu0 0
    %1272 = vmatpush1.bf16.msra.mxu0 %v1191
    %1273 = vmatprep.subr.bf16.mxu0 0
    %1274 = vmatpush1.bf16.msra.mxu0 0
    %1275 = vmatprep.subr.bf16.mxu0 0
    %1276 = vmatpush1.bf16.msra.mxu0 0
    %1277 = vmatprep.subr.bf16.mxu0 0
    %1278 = vmatpush1.bf16.msra.mxu0 0
    %1279 = vmatprep.subr.bf16.mxu0 0
    %1280 = vmatpush1.bf16.msra.mxu0 0
    %1281 = vmatprep.subr.bf16.mxu0 0
    %1282 = vmatpush1.bf16.msra.mxu0 0
    %1283 = vmatprep.subr.bf16.mxu0 0
    %1284 = vmatpush1.bf16.msra.mxu0 0
    %1285 = vmatprep.subr.bf16.mxu0 0
    %1286 = vmatpush1.bf16.msra.mxu0 0
    %1287 = vmatprep.subr.bf16.mxu0 0
    %1288 = vmatpush1.bf16.msra.mxu0 0
    %1289 = vmatprep.mubr.bf16.mxu0 0
    %1290 = vmatmul.mubr.bf16.gmra.mrb[0].mxu0 %v1055
    %v1291 = vpop.f32.mrb[0].mxu0
    %v1292 = vadd.f32 0.0, %v1291
    %v1293 = vpop.f32.mrb[0].mxu0
    %v1294 = vpop.f32.mrb[0].mxu0
    %v1295 = vpop.f32.mrb[0].mxu0
    %1296 = vdwg.mxu0
    %v1297 = vpack.c.bf16 %v1251, %v1251
    %v1298 = vpack.c.bf16 %v1253, %v1253
    %v1299 = vpack.c.bf16 %v1292, %v1292
    %v1300 = vld [vmem:[%s11] sm:$0xf]
    %s1301 = scalar_lea.vmem %s11, 4
    %v1302 = vld [vmem:[%s1301] sm:$0xf]
    %vm1303 = vcmask 64512
    %v1305 = vsel %vm1303, %v1302, 0
    %vm1307 = vcmask 1043456
    %v1309 = vsel %vm1307, %v1298, 0
    %1311 = vmatprep.subr.bf16.mxu0 0
    %1312 = vmatpush1.bf16.msra.mxu0 %v1309
    %1313 = vmatprep.subr.bf16.mxu0 0
    %1314 = vmatpush1.bf16.msra.mxu0 0
    %1315 = vmatprep.subr.bf16.mxu0 0
    %1316 = vmatpush1.bf16.msra.mxu0 0
    %1317 = vmatprep.subr.bf16.mxu0 0
    %1318 = vmatpush1.bf16.msra.mxu0 0
    %1319 = vmatprep.subr.bf16.mxu0 0
    %1320 = vmatpush1.bf16.msra.mxu0 0
    %1321 = vmatprep.subr.bf16.mxu0 0
    %1322 = vmatpush1.bf16.msra.mxu0 0
    %1323 = vmatprep.subr.bf16.mxu0 0
    %1324 = vmatpush1.bf16.msra.mxu0 0
    %1325 = vmatprep.subr.bf16.mxu0 0
    %1326 = vmatpush1.bf16.msra.mxu0 0
    %1327 = vmatprep.subr.bf16.mxu0 0
    %1328 = vmatpush1.bf16.msra.mxu0 0
    %1329 = vmatprep.subr.bf16.mxu0 0
    %1330 = vmatpush1.bf16.msra.mxu0 0
    %1331 = vmatprep.subr.bf16.mxu0 0
    %1332 = vmatpush1.bf16.msra.mxu0 0
    %1333 = vmatprep.subr.bf16.mxu0 0
    %1334 = vmatpush1.bf16.msra.mxu0 0
    %1335 = vmatprep.subr.bf16.mxu0 0
    %1336 = vmatpush1.bf16.msra.mxu0 0
    %1337 = vmatprep.subr.bf16.mxu0 0
    %1338 = vmatpush1.bf16.msra.mxu0 0
    %1339 = vmatprep.subr.bf16.mxu0 0
    %1340 = vmatpush1.bf16.msra.mxu0 0
    %1341 = vmatprep.subr.bf16.mxu0 0
    %1342 = vmatpush1.bf16.msra.mxu0 0
    %1343 = vmatprep.mubr.bf16.mxu0 0
    %1344 = vmatmul.mubr.bf16.gmra.mrb[0].mxu0 %v1305
    %v1345 = vpop.f32.mrb[0].mxu0
    %v1346 = vadd.f32 0.0, %v1345
    %v1347 = vpop.f32.mrb[0].mxu0
    %v1348 = vpop.f32.mrb[0].mxu0
    %v1349 = vpop.f32.mrb[0].mxu0
    %1350 = vdwg.mxu0
    %v1352 = vsel %vm1303, %v1300, 0
    %v1355 = vsel %vm1307, %v1297, 0
    %1357 = vmatprep.subr.bf16.mxu0 0
    %1358 = vmatpush1.bf16.msra.mxu0 %v1355
    %1359 = vmatprep.subr.bf16.mxu0 0
    %1360 = vmatpush1.bf16.msra.mxu0 0
    %1361 = vmatprep.subr.bf16.mxu0 0
    %1362 = vmatpush1.bf16.msra.mxu0 0
    %1363 = vmatprep.subr.bf16.mxu0 0
    %1364 = vmatpush1.bf16.msra.mxu0 0
    %1365 = vmatprep.subr.bf16.mxu0 0
    %1366 = vmatpush1.bf16.msra.mxu0 0
    %1367 = vmatprep.subr.bf16.mxu0 0
    %1368 = vmatpush1.bf16.msra.mxu0 0
    %1369 = vmatprep.subr.bf16.mxu0 0
    %1370 = vmatpush1.bf16.msra.mxu0 0
    %1371 = vmatprep.subr.bf16.mxu0 0
    %1372 = vmatpush1.bf16.msra.mxu0 0
    %1373 = vmatprep.subr.bf16.mxu0 0
    %1374 = vmatpush1.bf16.msra.mxu0 0
    %1375 = vmatprep.subr.bf16.mxu0 0
    %1376 = vmatpush1.bf16.msra.mxu0 0
    %1377 = vmatprep.subr.bf16.mxu0 0
    %1378 = vmatpush1.bf16.msra.mxu0 0
    %1379 = vmatprep.subr.bf16.mxu0 0
    %1380 = vmatpush1.bf16.msra.mxu0 0
    %1381 = vmatprep.subr.bf16.mxu0 0
    %1382 = vmatpush1.bf16.msra.mxu0 0
    %1383 = vmatprep.subr.bf16.mxu0 0
    %1384 = vmatpush1.bf16.msra.mxu0 0
    %1385 = vmatprep.subr.bf16.mxu0 0
    %1386 = vmatpush1.bf16.msra.mxu0 0
    %1387 = vmatprep.subr.bf16.mxu0 0
    %1388 = vmatpush1.bf16.msra.mxu0 0
    %1389 = vmatprep.mubr.bf16.mxu0 0
    %1390 = vmatmul.mubr.bf16.gmra.mrb[0].mxu0 %v1352
    %v1391 = vpop.f32.mrb[0].mxu0
    %v1392 = vadd.f32 %v1346, %v1391
    %v1393 = vpop.f32.mrb[0].mxu0
    %v1394 = vpop.f32.mrb[0].mxu0
    %v1395 = vpop.f32.mrb[0].mxu0
    %1396 = vdwg.mxu0
    %s1397 = scalar_lea.vmem %s11, 8
    %v1398 = vld [vmem:[%s1397] sm:$0xf]
    %v1400 = vsel %vm1303, %v1398, 0
    %v1403 = vsel %vm1307, %v1299, 0
    %1405 = vmatprep.subr.bf16.mxu0 0
    %1406 = vmatpush1.bf16.msra.mxu0 %v1403
    %1407 = vmatprep.subr.bf16.mxu0 0
    %1408 = vmatpush1.bf16.msra.mxu0 0
    %1409 = vmatprep.subr.bf16.mxu0 0
    %1410 = vmatpush1.bf16.msra.mxu0 0
    %1411 = vmatprep.subr.bf16.mxu0 0
    %1412 = vmatpush1.bf16.msra.mxu0 0
    %1413 = vmatprep.subr.bf16.mxu0 0
    %1414 = vmatpush1.bf16.msra.mxu0 0
    %1415 = vmatprep.subr.bf16.mxu0 0
    %1416 = vmatpush1.bf16.msra.mxu0 0
    %1417 = vmatprep.subr.bf16.mxu0 0
    %1418 = vmatpush1.bf16.msra.mxu0 0
    %1419 = vmatprep.subr.bf16.mxu0 0
    %1420 = vmatpush1.bf16.msra.mxu0 0
    %1421 = vmatprep.subr.bf16.mxu0 0
    %1422 = vmatpush1.bf16.msra.mxu0 0
    %1423 = vmatprep.subr.bf16.mxu0 0
    %1424 = vmatpush1.bf16.msra.mxu0 0
    %1425 = vmatprep.subr.bf16.mxu0 0
    %1426 = vmatpush1.bf16.msra.mxu0 0
    %1427 = vmatprep.subr.bf16.mxu0 0
    %1428 = vmatpush1.bf16.msra.mxu0 0
    %1429 = vmatprep.subr.bf16.mxu0 0
    %1430 = vmatpush1.bf16.msra.mxu0 0
    %1431 = vmatprep.subr.bf16.mxu0 0
    %1432 = vmatpush1.bf16.msra.mxu0 0
    %1433 = vmatprep.subr.bf16.mxu0 0
    %1434 = vmatpush1.bf16.msra.mxu0 0
    %1435 = vmatprep.subr.bf16.mxu0 0
    %1436 = vmatpush1.bf16.msra.mxu0 0
    %1437 = vmatprep.mubr.bf16.mxu0 0
    %1438 = vmatmul.mubr.bf16.gmra.mrb[0].mxu0 %v1400
    %v1439 = vpop.f32.mrb[0].mxu0
    %v1440 = vadd.f32 0.0, %v1439
    %v1441 = vpop.f32.mrb[0].mxu0
    %v1442 = vpop.f32.mrb[0].mxu0
    %v1443 = vpop.f32.mrb[0].mxu0
    %1444 = vdwg.mxu0
    %v1445 = vadd.f32 %v1392, %v1440
    %v1446 = vld [vmem:[#allocation13] sm:$0x1]
    %v1448 = vlaneseq
    %v1449 = vshrl.u32 %v1448, 7
    %v1450 = vsub.s32 0, %v1449
    %v1451 = vrot.slane %v1446, %v1450
    %v1453 = vadd.f32 %v1445, %v1451
    %v1454 = vmax.f32 %v1453, 0.0
    %v1455 = vpack.c.bf16 %v1454, %v1454
    %v1456 = vld [vmem:[%s12] sm:$0xf]
    %v1458 = vsel %vm1303, %v1456, 0
    %v1461 = vsel %vm1307, %v1455, 0
    %1463 = vmatprep.subr.bf16.mxu0 0
    %1464 = vmatpush1.bf16.msra.mxu0 %v1461
    %1465 = vmatprep.subr.bf16.mxu0 0
    %1466 = vmatpush1.bf16.msra.mxu0 0
    %1467 = vmatprep.subr.bf16.mxu0 0
    %1468 = vmatpush1.bf16.msra.mxu0 0
    %1469 = vmatprep.subr.bf16.mxu0 0
    %1470 = vmatpush1.bf16.msra.mxu0 0
    %1471 = vmatprep.subr.bf16.mxu0 0
    %1472 = vmatpush1.bf16.msra.mxu0 0
    %1473 = vmatprep.subr.bf16.mxu0 0
    %1474 = vmatpush1.bf16.msra.mxu0 0
    %1475 = vmatprep.subr.bf16.mxu0 0
    %1476 = vmatpush1.bf16.msra.mxu0 0
    %1477 = vmatprep.subr.bf16.mxu0 0
    %1478 = vmatpush1.bf16.msra.mxu0 0
    %1479 = vmatprep.subr.bf16.mxu0 0
    %1480 = vmatpush1.bf16.msra.mxu0 0
    %1481 = vmatprep.subr.bf16.mxu0 0
    %1482 = vmatpush1.bf16.msra.mxu0 0
    %1483 = vmatprep.subr.bf16.mxu0 0
    %1484 = vmatpush1.bf16.msra.mxu0 0
    %1485 = vmatprep.subr.bf16.mxu0 0
    %1486 = vmatpush1.bf16.msra.mxu0 0
    %1487 = vmatprep.subr.bf16.mxu0 0
    %1488 = vmatpush1.bf16.msra.mxu0 0
    %1489 = vmatprep.subr.bf16.mxu0 0
    %1490 = vmatpush1.bf16.msra.mxu0 0
    %1491 = vmatprep.subr.bf16.mxu0 0
    %1492 = vmatpush1.bf16.msra.mxu0 0
    %1493 = vmatprep.subr.bf16.mxu0 0
    %1494 = vmatpush1.bf16.msra.mxu0 0
    %1495 = vmatprep.mubr.bf16.mxu0 0
    %1496 = vmatmul.mubr.bf16.gmra.mrb[0].mxu0 %v1458
    %v1497 = vpop.f32.mrb[0].mxu0
    %v1498 = vadd.f32 0.0, %v1497
    %v1499 = vpop.f32.mrb[0].mxu0
    %v1500 = vpop.f32.mrb[0].mxu0
    %v1501 = vpop.f32.mrb[0].mxu0
    %1502 = vdwg.mxu0
    %s1503 = scalar_lea.vmem %s12, 4
    %v1504 = vld [vmem:[%s1503] sm:$0xf]
    %v1506 = vsel %vm1303, %v1504, 0
    %1508 = vmatprep.subr.bf16.mxu0 0
    %1509 = vmatpush1.bf16.msra.mxu0 %v1461
    %1510 = vmatprep.subr.bf16.mxu0 0
    %1511 = vmatpush1.bf16.msra.mxu0 0
    %1512 = vmatprep.subr.bf16.mxu0 0
    %1513 = vmatpush1.bf16.msra.mxu0 0
    %1514 = vmatprep.subr.bf16.mxu0 0
    %1515 = vmatpush1.bf16.msra.mxu0 0
    %1516 = vmatprep.subr.bf16.mxu0 0
    %1517 = vmatpush1.bf16.msra.mxu0 0
    %1518 = vmatprep.subr.bf16.mxu0 0
    %1519 = vmatpush1.bf16.msra.mxu0 0
    %1520 = vmatprep.subr.bf16.mxu0 0
    %1521 = vmatpush1.bf16.msra.mxu0 0
    %1522 = vmatprep.subr.bf16.mxu0 0
    %1523 = vmatpush1.bf16.msra.mxu0 0
    %1524 = vmatprep.subr.bf16.mxu0 0
    %1525 = vmatpush1.bf16.msra.mxu0 0
    %1526 = vmatprep.subr.bf16.mxu0 0
    %1527 = vmatpush1.bf16.msra.mxu0 0
    %1528 = vmatprep.subr.bf16.mxu0 0
    %1529 = vmatpush1.bf16.msra.mxu0 0
    %1530 = vmatprep.subr.bf16.mxu0 0
    %1531 = vmatpush1.bf16.msra.mxu0 0
    %1532 = vmatprep.subr.bf16.mxu0 0
    %1533 = vmatpush1.bf16.msra.mxu0 0
    %1534 = vmatprep.subr.bf16.mxu0 0
    %1535 = vmatpush1.bf16.msra.mxu0 0
    %1536 = vmatprep.subr.bf16.mxu0 0
    %1537 = vmatpush1.bf16.msra.mxu0 0
    %1538 = vmatprep.subr.bf16.mxu0 0
    %1539 = vmatpush1.bf16.msra.mxu0 0
    %1540 = vmatprep.mubr.bf16.mxu0 0
    %1541 = vmatmul.mubr.bf16.gmra.mrb[0].mxu0 %v1506
    %v1542 = vpop.f32.mrb[0].mxu0
    %v1543 = vadd.f32 0.0, %v1542
    %v1544 = vpop.f32.mrb[0].mxu0
    %v1545 = vpop.f32.mrb[0].mxu0
    %v1546 = vpop.f32.mrb[0].mxu0
    %1547 = vdwg.mxu0
    %v1548 = vmax.f32 %v1498, %v1543
    %s1549 = scalar_lea.vmem %s12, 8
    %v1550 = vld [vmem:[%s1549] sm:$0xf]
    %v1552 = vsel %vm1303, %v1550, 0
    %1554 = vmatprep.subr.bf16.mxu0 0
    %1555 = vmatpush1.bf16.msra.mxu0 %v1461
    %1556 = vmatprep.subr.bf16.mxu0 0
    %1557 = vmatpush1.bf16.msra.mxu0 0
    %1558 = vmatprep.subr.bf16.mxu0 0
    %1559 = vmatpush1.bf16.msra.mxu0 0
    %1560 = vmatprep.subr.bf16.mxu0 0
    %1561 = vmatpush1.bf16.msra.mxu0 0
    %1562 = vmatprep.subr.bf16.mxu0 0
    %1563 = vmatpush1.bf16.msra.mxu0 0
    %1564 = vmatprep.subr.bf16.mxu0 0
    %1565 = vmatpush1.bf16.msra.mxu0 0
    %1566 = vmatprep.subr.bf16.mxu0 0
    %1567 = vmatpush1.bf16.msra.mxu0 0
    %1568 = vmatprep.subr.bf16.mxu0 0
    %1569 = vmatpush1.bf16.msra.mxu0 0
    %1570 = vmatprep.subr.bf16.mxu0 0
    %1571 = vmatpush1.bf16.msra.mxu0 0
    %1572 = vmatprep.subr.bf16.mxu0 0
    %1573 = vmatpush1.bf16.msra.mxu0 0
    %1574 = vmatprep.subr.bf16.mxu0 0
    %1575 = vmatpush1.bf16.msra.mxu0 0
    %1576 = vmatprep.subr.bf16.mxu0 0
    %1577 = vmatpush1.bf16.msra.mxu0 0
    %1578 = vmatprep.subr.bf16.mxu0 0
    %1579 = vmatpush1.bf16.msra.mxu0 0
    %1580 = vmatprep.subr.bf16.mxu0 0
    %1581 = vmatpush1.bf16.msra.mxu0 0
    %1582 = vmatprep.subr.bf16.mxu0 0
    %1583 = vmatpush1.bf16.msra.mxu0 0
    %1584 = vmatprep.subr.bf16.mxu0 0
    %1585 = vmatpush1.bf16.msra.mxu0 0
    %1586 = vmatprep.mubr.bf16.mxu0 0
    %1587 = vmatmul.mubr.bf16.gmra.mrb[0].mxu0 %v1552
    %v1588 = vpop.f32.mrb[0].mxu0
    %v1589 = vadd.f32 0.0, %v1588
    %v1590 = vpop.f32.mrb[0].mxu0
    %v1591 = vpop.f32.mrb[0].mxu0
    %v1592 = vpop.f32.mrb[0].mxu0
    %1593 = vdwg.mxu0
    %v1594 = vmax.f32 %v1548, %v1589
    %1596 = vrot.lane.b32.xlu0 %v1594, 64
    %v1597 = vpop.permute.xlu0 %1596
    %v1599 = vmax.f32 %v1594, %v1597
    %vm1600 = vcmask 523264
    %1601 = vst.msk [vmem:[#allocation14] sm:$0xff] %vm1600, %v1599
    // Predicated region
    $region82: #{tpu_custom_call.1} parent=1 // pred_check
      _
    $region83: #{tpu_custom_call.1} parent=1 // pred_check_branch
      %1603 = sbr.rel (0) target = $region85
    $region84: #{tpu_custom_call.1} parent=1 // pred_region
      %s1605 = ssub.s32 128, 128
      %1606 = vsyncadd [#allocation4], %s1605
      %s1608 = sshll.u32 [#allocation14], 4
      %s1609 = int_to_ptr.vmem [resolvable:$true] %s1608
      %1611 = dma.vmem_to_hbm [thread:$0]  %s1609, 128, %s13, [#allocation4]
    $region85: #{tpu_custom_call.1} parent=1 // pred_fallthru
      _
    // Predicated region
    $region86: #{tpu_custom_call.1} parent=1 // pred_check
      _
    $region87: #{tpu_custom_call.1} parent=1 // pred_check_branch
      %1613 = sbr.rel (0) target = $region89
    $region88: #{tpu_custom_call.1} parent=1 // pred_region
      %1614 = dma.done [#allocation4], 128
    $region89: #{tpu_custom_call.1} parent=1 // pred_fallthru
      _
    %1615 = vsyncpa [#allocation3], 1
    %1616 = vsyncpa [#allocation6], 1
    %1617 = vsyncpa [#allocation9], 1
    %1618 = vsyncpa [#allocation12], 1
    %1619 = vsyncpa [#allocation4], 1

</llo_original>
